<compile_context>
chip_gen: v7x
topology: tpu7x:2x2x1
jax: 0.10.0
libtpu: 0.0.40
codegen_flags: <defaults>
</compile_context>

<pallas_src>
import functools

import jax
import jax.numpy as jnp
from jax import lax
from jax.experimental import pallas as pl
from jax.experimental.pallas import tpu as pltpu


def _layer_norm(x, gamma, beta, eps):
    mean = jnp.mean(x, axis=-1, keepdims=True)
    var = jnp.mean((x - mean) ** 2, axis=-1, keepdims=True)
    return (x - mean) * lax.rsqrt(var + eps) * gamma + beta


def gpt_neo_block_kernel(x_ref, ln1_g_ref, ln1_b_ref,
                         wq_ref, wk_ref, wv_ref, wo_h_ref, bo_ref,
                         ln2_g_ref, ln2_b_ref,
                         wfc_ref, bfc_ref, wpr_ref, bpr_ref,
                         o_ref, *, num_heads, head_dim, eps):
    x = x_ref[0].astype(jnp.float32)                # (S, H) current batch element
    S, H = x.shape

    # ---- LayerNorm 1 (f32 statistics) ----
    h = _layer_norm(x, ln1_g_ref[0], ln1_b_ref[0], eps)
    h_bf = h.astype(jnp.bfloat16)

    # ---- QKV projections: full-width matmuls (good MXU M/N), bf16 in / f32 acc ----
    q = jnp.dot(h_bf, wq_ref[...], preferred_element_type=jnp.float32)   # (S, H)
    k = jnp.dot(h_bf, wk_ref[...], preferred_element_type=jnp.float32)
    v = jnp.dot(h_bf, wv_ref[...], preferred_element_type=jnp.float32)

    # ---- Per-head attention + fused output projection accumulation ----
    # No explicit transpose (dot_general contracts last dims) and no concat
    # (Wo is pre-split per head; contributions are summed in f32).
    acc = jnp.zeros((S, H), jnp.float32)
    for hh in range(num_heads):                     # static unrolled head loop
        sl = slice(hh * head_dim, (hh + 1) * head_dim)
        qh = q[:, sl].astype(jnp.bfloat16)
        kh = k[:, sl].astype(jnp.bfloat16)
        vh = v[:, sl].astype(jnp.bfloat16)
        # scores = qh @ kh^T without materializing a transpose.
        # NOTE: GPT-Neo applies no 1/sqrt(head_dim) scaling and no causal mask
        # in the provided reference _attn.
        s = lax.dot_general(qh, kh, (((1,), (1,)), ((), ())),
                            preferred_element_type=jnp.float32)          # (S, S)
        s = s - jnp.max(s, axis=-1, keepdims=True)
        e = jnp.exp(s)
        p = e * pl.reciprocal(jnp.sum(e, axis=-1, keepdims=True), approx=True)
        ctx = jnp.dot(p.astype(jnp.bfloat16), vh,
                      preferred_element_type=jnp.float32)                # (S, hd)
        acc = acc + jnp.dot(ctx.astype(jnp.bfloat16), wo_h_ref[hh],
                            preferred_element_type=jnp.float32)          # (S, H)

    attn = acc + bo_ref[0]
    h1 = attn + x                                   # residual 1 (f32)

    # ---- LayerNorm 2 + MLP (exact erf GELU, f32 elementwise, bf16 MXU) ----
    h2 = _layer_norm(h1, ln2_g_ref[0], ln2_b_ref[0], eps)
    f = jnp.dot(h2.astype(jnp.bfloat16), wfc_ref[...],
                preferred_element_type=jnp.float32) + bfc_ref[0]
    f = 0.5 * f * (1.0 + lax.erf(f * (1.0 / jnp.sqrt(2.0).astype(jnp.float32))))
    f = jnp.dot(f.astype(jnp.bfloat16), wpr_ref[...],
                preferred_element_type=jnp.float32) + bpr_ref[0]

    o_ref[0] = (h1 + f).astype(o_ref.dtype)         # residual 2


def gpt_neo_block(x, params, *, num_heads, eps=1e-5):
    B, S, H = x.shape
    head_dim = H // num_heads
    I = params["wfc_t"].shape[1]
    bf16 = jnp.bfloat16

    # Weights feeding the MXU are cast to bf16 on the host (halves DMA/VMEM);
    # LN params and biases stay f32.  Wo is pre-split per head.
    wq = params["wq_t"].astype(bf16)
    wk = params["wk_t"].astype(bf16)
    wv = params["wv_t"].astype(bf16)
    wo_heads = params["wo_t"].reshape(num_heads, head_dim, H).astype(bf16)
    wfc = params["wfc_t"].astype(bf16)
    wpr = params["wpr_t"].astype(bf16)

    def const_spec(shape):
        return pl.BlockSpec(shape, lambda b: (0,) * len(shape))

    in_specs = [
        pl.BlockSpec((1, S, H), lambda b: (b, 0, 0)),     # hidden_states
        const_spec((1, H)), const_spec((1, H)),           # ln1 gamma/beta
        const_spec((H, H)), const_spec((H, H)),           # Wq^T, Wk^T
        const_spec((H, H)),                               # Wv^T
        const_spec((num_heads, head_dim, H)),             # Wo^T split per head
        const_spec((1, H)),                               # out_proj bias
        const_spec((1, H)), const_spec((1, H)),           # ln2 gamma/beta
        const_spec((H, I)), const_spec((1, I)),           # Wfc^T, fc bias
        const_spec((I, H)), const_spec((1, H)),           # Wproj^T, proj bias
    ]

    # Explicit VMEM budget: resident bf16 weights + per-step activations,
    # with headroom (double buffering), clamped to a safe range.
    weight_bytes = 2 * (4 * H * H + 2 * H * I)
    act_bytes = 4 * S * (6 * H + 2 * I) + 4 * 2 * S * S
    vmem_limit = int(min(100 * 2**20, max(32 * 2**20, 4 * (weight_bytes + act_bytes))))

    kernel = functools.partial(gpt_neo_block_kernel,
                               num_heads=num_heads, head_dim=head_dim, eps=eps)

    return pl.pallas_call(
        kernel,
        out_shape=jax.ShapeDtypeStruct((B, S, H), x.dtype),
        grid_spec=pltpu.PrefetchScalarGridSpec(
            num_scalar_prefetch=0,
            grid=(B,),
            in_specs=in_specs,
            out_specs=pl.BlockSpec((1, S, H), lambda b: (b, 0, 0)),
        ),
        compiler_params=pltpu.CompilerParams(
            dimension_semantics=("parallel",),
            vmem_limit_bytes=vmem_limit),
    )(x, params["ln1_g"], params["ln1_b"],
      wq, wk, wv, wo_heads, params["bo"],
      params["ln2_g"], params["ln2_b"],
      wfc, params["bfc"], wpr, params["bpr"])


def _reference(x, p, num_heads, eps=1e-5):
    """Pure-JAX f32 reference (matches the PyTorch module in eval mode)."""
    B, S, H = x.shape
    hd = H // num_heads

    def ln(v, g, b):
        m = v.mean(-1, keepdims=True)
        var = ((v - m) ** 2).mean(-1, keepdims=True)
        return (v - m) / jnp.sqrt(var + eps) * g + b

    h = ln(x, p["ln1_g"][0], p["ln1_b"][0])
    q = h @ p["wq_t"]
    k = h @ p["wk_t"]
    v = h @ p["wv_t"]

    def split(t):  # (B,S,H) -> (B,nH,S,hd)
        return t.reshape(B, S, num_heads, hd).transpose(0, 2, 1, 3)

    q, k, v = split(q), split(k), split(v)
    scores = jnp.einsum("bhqd,bhkd->bhqk", q, k)
    pattn = jax.nn.softmax(scores, axis=-1)
    a = jnp.einsum("bhqk,bhkd->bhqd", pattn, v)
    a = a.transpose(0, 2, 1, 3).reshape(B, S, H)
    a = a @ p["wo_t"] + p["bo"][0]
    h1 = a + x
    h2 = ln(h1, p["ln2_g"][0], p["ln2_b"][0])
    f = h2 @ p["wfc_t"] + p["bfc"][0]
    f = 0.5 * f * (1.0 + lax.erf(f / jnp.sqrt(2.0)))
    f = f @ p["wpr_t"] + p["bpr"][0]
    return h1 + f


if __name__ == "__main__":
    # Small GPT-Neo-like config: hidden=32, heads=4, inner=4*hidden=128.
    B, S, H, num_heads = 2, 8, 32, 4
    I = 4 * H

    key = jax.random.PRNGKey(0)
    keys = jax.random.split(key, 8)

    def w(k, shape):
        return (0.02 * jax.random.normal(k, shape)).astype(jnp.float32)

    params = {
        "ln1_g": jnp.ones((1, H), jnp.float32),
        "ln1_b": jnp.zeros((1, H), jnp.float32),
        "wq_t": w(keys[0], (H, H)),
        "wk_t": w(keys[1], (H, H)),
        "wv_t": w(keys[2], (H, H)),
        "wo_t": w(keys[3], (H, H)),
        "bo": jnp.zeros((1, H), jnp.float32),
        "ln2_g": jnp.ones((1, H), jnp.float32),
        "ln2_b": jnp.zeros((1, H), jnp.float32),
        "wfc_t": w(keys[4], (H, I)),
        "bfc": jnp.zeros((1, I), jnp.float32),
        "wpr_t": w(keys[5], (I, H)),
        "bpr": jnp.zeros((1, H), jnp.float32),
    }

    x = jax.random.normal(keys[6], (B, S, H), dtype=jnp.float32)

    out = gpt_neo_block(x, params, num_heads=num_heads)
    out = jax.block_until_ready(out)

    ref = _reference(x, params, num_heads)
    assert out.shape == (B, S, H)
    assert out.dtype == x.dtype
    # bf16 MXU inputs + approx reciprocal => loose (but meaningful) tolerance
    # against the f32 reference.
    assert jnp.allclose(out, ref, rtol=2e-2, atol=2e-2), "mismatch vs JAX reference"

    print("KERNEL_OK")
</pallas_src>

<mosaic_0001>
module attributes {stable_mosaic.version = 11 : i64} {
  func.func @gpt_neo_block_kernel(%arg0: i32, %arg1: memref<1x8x32xf32, #tpu.memory_space<vmem>>, %arg2: memref<1x32xf32, #tpu.memory_space<vmem>>, %arg3: memref<1x32xf32, #tpu.memory_space<vmem>>, %arg4: memref<32x32xbf16, #tpu.memory_space<vmem>>, %arg5: memref<32x32xbf16, #tpu.memory_space<vmem>>, %arg6: memref<32x32xbf16, #tpu.memory_space<vmem>>, %arg7: memref<4x8x32xbf16, #tpu.memory_space<vmem>>, %arg8: memref<1x32xf32, #tpu.memory_space<vmem>>, %arg9: memref<1x32xf32, #tpu.memory_space<vmem>>, %arg10: memref<1x32xf32, #tpu.memory_space<vmem>>, %arg11: memref<32x128xbf16, #tpu.memory_space<vmem>>, %arg12: memref<1x128xf32, #tpu.memory_space<vmem>>, %arg13: memref<128x32xbf16, #tpu.memory_space<vmem>>, %arg14: memref<1x32xf32, #tpu.memory_space<vmem>>, %arg15: memref<1x8x32xf32, #tpu.memory_space<vmem>>) attributes {dimension_semantics = [#tpu.dimension_semantics<parallel>], iteration_bounds = array<i64: 2>, scalar_prefetch = 0 : i64, scratch_operands = 0 : i64, tpu.core_type = #tpu.core_type<tc>, window_params = [{transform_indices = @transform_0, window_bounds = array<i64: 1, 8, 32>}, {pipeline_mode = #tpu.pipeline_mode<synchronous>, transform_indices = @transform_1, window_bounds = array<i64: 1, 32>}, {pipeline_mode = #tpu.pipeline_mode<synchronous>, transform_indices = @transform_2, window_bounds = array<i64: 1, 32>}, {pipeline_mode = #tpu.pipeline_mode<synchronous>, transform_indices = @transform_3, window_bounds = array<i64: 32, 32>}, {pipeline_mode = #tpu.pipeline_mode<synchronous>, transform_indices = @transform_4, window_bounds = array<i64: 32, 32>}, {pipeline_mode = #tpu.pipeline_mode<synchronous>, transform_indices = @transform_5, window_bounds = array<i64: 32, 32>}, {pipeline_mode = #tpu.pipeline_mode<synchronous>, transform_indices = @transform_6, window_bounds = array<i64: 4, 8, 32>}, {pipeline_mode = #tpu.pipeline_mode<synchronous>, transform_indices = @transform_7, window_bounds = array<i64: 1, 32>}, {pipeline_mode = #tpu.pipeline_mode<synchronous>, transform_indices = @transform_8, window_bounds = array<i64: 1, 32>}, {pipeline_mode = #tpu.pipeline_mode<synchronous>, transform_indices = @transform_9, window_bounds = array<i64: 1, 32>}, {pipeline_mode = #tpu.pipeline_mode<synchronous>, transform_indices = @transform_10, window_bounds = array<i64: 32, 128>}, {pipeline_mode = #tpu.pipeline_mode<synchronous>, transform_indices = @transform_11, window_bounds = array<i64: 1, 128>}, {pipeline_mode = #tpu.pipeline_mode<synchronous>, transform_indices = @transform_12, window_bounds = array<i64: 128, 32>}, {pipeline_mode = #tpu.pipeline_mode<synchronous>, transform_indices = @transform_13, window_bounds = array<i64: 1, 32>}, {transform_indices = @transform_14, window_bounds = array<i64: 1, 8, 32>}]} {
    %c0 = arith.constant 0 : index
    %c0_0 = arith.constant 0 : index
    %c0_1 = arith.constant 0 : index
    %0 = vector.load %arg1[%c0, %c0_0, %c0_1] : memref<1x8x32xf32, #tpu.memory_space<vmem>>, vector<1x8x32xf32>
    %1 = vector.shape_cast %0 : vector<1x8x32xf32> to vector<8x32xf32>
    %c0_2 = arith.constant 0 : index
    %c0_3 = arith.constant 0 : index
    %2 = vector.load %arg2[%c0_2, %c0_3] : memref<1x32xf32, #tpu.memory_space<vmem>>, vector<1x32xf32>
    %3 = vector.shape_cast %2 : vector<1x32xf32> to vector<32xf32>
    %c0_4 = arith.constant 0 : index
    %c0_5 = arith.constant 0 : index
    %4 = vector.load %arg3[%c0_4, %c0_5] : memref<1x32xf32, #tpu.memory_space<vmem>>, vector<1x32xf32>
    %5 = vector.shape_cast %4 : vector<1x32xf32> to vector<32xf32>
    %cst = arith.constant dense<0.000000e+00> : vector<8xf32>
    %6 = vector.multi_reduction <add>, %1, %cst [1] : vector<8x32xf32> to vector<8xf32>
    %7 = vector.shape_cast %6 : vector<8xf32> to vector<8x1xf32>
    %cst_6 = arith.constant 3.200000e+01 : f32
    %8 = vector.broadcast %cst_6 : f32 to vector<8x1xf32>
    %9 = arith.divf %7, %8 : vector<8x1xf32>
    %10 = vector.broadcast %9 : vector<8x1xf32> to vector<8x32xf32>
    %11 = arith.subf %1, %10 : vector<8x32xf32>
    %12 = arith.mulf %11, %11 : vector<8x32xf32>
    %cst_7 = arith.constant dense<0.000000e+00> : vector<8xf32>
    %13 = vector.multi_reduction <add>, %12, %cst_7 [1] : vector<8x32xf32> to vector<8xf32>
    %14 = vector.shape_cast %13 : vector<8xf32> to vector<8x1xf32>
    %cst_8 = arith.constant 3.200000e+01 : f32
    %15 = vector.broadcast %cst_8 : f32 to vector<8x1xf32>
    %16 = arith.divf %14, %15 : vector<8x1xf32>
    %17 = vector.broadcast %9 : vector<8x1xf32> to vector<8x32xf32>
    %18 = arith.subf %1, %17 : vector<8x32xf32>
    %cst_9 = arith.constant 9.99999974E-6 : f32
    %19 = vector.broadcast %cst_9 : f32 to vector<8x1xf32>
    %20 = arith.addf %16, %19 : vector<8x1xf32>
    %21 = math.rsqrt %20 : vector<8x1xf32>
    %22 = vector.broadcast %21 : vector<8x1xf32> to vector<8x32xf32>
    %23 = arith.mulf %18, %22 : vector<8x32xf32>
    %24 = vector.shape_cast %3 : vector<32xf32> to vector<1x32xf32>
    %25 = vector.broadcast %24 : vector<1x32xf32> to vector<8x32xf32>
    %26 = arith.mulf %23, %25 : vector<8x32xf32>
    %27 = vector.shape_cast %5 : vector<32xf32> to vector<1x32xf32>
    %28 = vector.broadcast %27 : vector<1x32xf32> to vector<8x32xf32>
    %29 = arith.addf %26, %28 : vector<8x32xf32>
    %30 = arith.truncf %29 : vector<8x32xf32> to vector<8x32xbf16>
    %c0_10 = arith.constant 0 : index
    %c0_11 = arith.constant 0 : index
    %31 = vector.load %arg4[%c0_10, %c0_11] : memref<32x32xbf16, #tpu.memory_space<vmem>>, vector<32x32xbf16>
    %cst_12 = arith.constant dense<0.000000e+00> : vector<8x32xf32>
    %32 = tpu.matmul %30, %31, %cst_12 {dimension_numbers = #tpu.dot_dimension_numbers<[1], [0], [0], [1], [0, 0, 1, 1], [], []>} : vector<8x32xbf16>, vector<32x32xbf16>, vector<8x32xf32> -> vector<8x32xf32>
    %c0_13 = arith.constant 0 : index
    %c0_14 = arith.constant 0 : index
    %33 = vector.load %arg5[%c0_13, %c0_14] : memref<32x32xbf16, #tpu.memory_space<vmem>>, vector<32x32xbf16>
    %cst_15 = arith.constant dense<0.000000e+00> : vector<8x32xf32>
    %34 = tpu.matmul %30, %33, %cst_15 {dimension_numbers = #tpu.dot_dimension_numbers<[1], [0], [0], [1], [0, 0, 1, 1], [], []>} : vector<8x32xbf16>, vector<32x32xbf16>, vector<8x32xf32> -> vector<8x32xf32>
    %c0_16 = arith.constant 0 : index
    %c0_17 = arith.constant 0 : index
    %35 = vector.load %arg6[%c0_16, %c0_17] : memref<32x32xbf16, #tpu.memory_space<vmem>>, vector<32x32xbf16>
    %cst_18 = arith.constant dense<0.000000e+00> : vector<8x32xf32>
    %36 = tpu.matmul %30, %35, %cst_18 {dimension_numbers = #tpu.dot_dimension_numbers<[1], [0], [0], [1], [0, 0, 1, 1], [], []>} : vector<8x32xbf16>, vector<32x32xbf16>, vector<8x32xf32> -> vector<8x32xf32>
    %cst_19 = arith.constant 0.000000e+00 : f32
    %37 = vector.broadcast %cst_19 : f32 to vector<8x32xf32>
    %38 = vector.extract_strided_slice %32 {offsets = [0, 0], sizes = [8, 8], strides = [1, 1]} : vector<8x32xf32> to vector<8x8xf32>
    %39 = arith.truncf %38 : vector<8x8xf32> to vector<8x8xbf16>
    %40 = vector.extract_strided_slice %34 {offsets = [0, 0], sizes = [8, 8], strides = [1, 1]} : vector<8x32xf32> to vector<8x8xf32>
    %41 = arith.truncf %40 : vector<8x8xf32> to vector<8x8xbf16>
    %42 = vector.extract_strided_slice %36 {offsets = [0, 0], sizes = [8, 8], strides = [1, 1]} : vector<8x32xf32> to vector<8x8xf32>
    %43 = arith.truncf %42 : vector<8x8xf32> to vector<8x8xbf16>
    %cst_20 = arith.constant dense<0.000000e+00> : vector<8x8xf32>
    %44 = tpu.matmul %39, %41, %cst_20 {dimension_numbers = #tpu.dot_dimension_numbers<[1], [1], [0], [0], [0, 0, 1, 0], [], []>} : vector<8x8xbf16>, vector<8x8xbf16>, vector<8x8xf32> -> vector<8x8xf32>
    %cst_21 = arith.constant dense<0xFF800000> : vector<8xf32>
    %45 = vector.multi_reduction <maximumf>, %44, %cst_21 [1] : vector<8x8xf32> to vector<8xf32>
    %46 = vector.shape_cast %45 : vector<8xf32> to vector<8x1xf32>
    %47 = vector.broadcast %46 : vector<8x1xf32> to vector<8x8xf32>
    %48 = arith.subf %44, %47 : vector<8x8xf32>
    %49 = math.exp %48 : vector<8x8xf32>
    %cst_22 = arith.constant dense<0.000000e+00> : vector<8xf32>
    %50 = vector.multi_reduction <add>, %49, %cst_22 [1] : vector<8x8xf32> to vector<8xf32>
    %51 = vector.shape_cast %50 : vector<8xf32> to vector<8x1xf32>
    %52 = tpu.reciprocal %51 {approx = true} : vector<8x1xf32> -> vector<8x1xf32>
    %53 = vector.broadcast %52 : vector<8x1xf32> to vector<8x8xf32>
    %54 = arith.mulf %49, %53 : vector<8x8xf32>
    %55 = arith.truncf %54 : vector<8x8xf32> to vector<8x8xbf16>
    %cst_23 = arith.constant dense<0.000000e+00> : vector<8x8xf32>
    %56 = tpu.matmul %55, %43, %cst_23 {dimension_numbers = #tpu.dot_dimension_numbers<[1], [0], [0], [1], [0, 0, 1, 1], [], []>} : vector<8x8xbf16>, vector<8x8xbf16>, vector<8x8xf32> -> vector<8x8xf32>
    %57 = arith.truncf %56 : vector<8x8xf32> to vector<8x8xbf16>
    %c0_24 = arith.constant 0 : index
    %c0_25 = arith.constant 0 : index
    %c0_26 = arith.constant 0 : index
    %58 = vector.load %arg7[%c0_24, %c0_25, %c0_26] : memref<4x8x32xbf16, #tpu.memory_space<vmem>>, vector<1x8x32xbf16>
    %59 = vector.shape_cast %58 : vector<1x8x32xbf16> to vector<8x32xbf16>
    %cst_27 = arith.constant dense<0.000000e+00> : vector<8x32xf32>
    %60 = tpu.matmul %57, %59, %cst_27 {dimension_numbers = #tpu.dot_dimension_numbers<[1], [0], [0], [1], [0, 0, 1, 1], [], []>} : vector<8x8xbf16>, vector<8x32xbf16>, vector<8x32xf32> -> vector<8x32xf32>
    %61 = arith.addf %37, %60 : vector<8x32xf32>
    %62 = vector.extract_strided_slice %32 {offsets = [0, 8], sizes = [8, 8], strides = [1, 1]} : vector<8x32xf32> to vector<8x8xf32>
    %63 = arith.truncf %62 : vector<8x8xf32> to vector<8x8xbf16>
    %64 = vector.extract_strided_slice %34 {offsets = [0, 8], sizes = [8, 8], strides = [1, 1]} : vector<8x32xf32> to vector<8x8xf32>
    %65 = arith.truncf %64 : vector<8x8xf32> to vector<8x8xbf16>
    %66 = vector.extract_strided_slice %36 {offsets = [0, 8], sizes = [8, 8], strides = [1, 1]} : vector<8x32xf32> to vector<8x8xf32>
    %67 = arith.truncf %66 : vector<8x8xf32> to vector<8x8xbf16>
    %cst_28 = arith.constant dense<0.000000e+00> : vector<8x8xf32>
    %68 = tpu.matmul %63, %65, %cst_28 {dimension_numbers = #tpu.dot_dimension_numbers<[1], [1], [0], [0], [0, 0, 1, 0], [], []>} : vector<8x8xbf16>, vector<8x8xbf16>, vector<8x8xf32> -> vector<8x8xf32>
    %cst_29 = arith.constant dense<0xFF800000> : vector<8xf32>
    %69 = vector.multi_reduction <maximumf>, %68, %cst_29 [1] : vector<8x8xf32> to vector<8xf32>
    %70 = vector.shape_cast %69 : vector<8xf32> to vector<8x1xf32>
    %71 = vector.broadcast %70 : vector<8x1xf32> to vector<8x8xf32>
    %72 = arith.subf %68, %71 : vector<8x8xf32>
    %73 = math.exp %72 : vector<8x8xf32>
    %cst_30 = arith.constant dense<0.000000e+00> : vector<8xf32>
    %74 = vector.multi_reduction <add>, %73, %cst_30 [1] : vector<8x8xf32> to vector<8xf32>
    %75 = vector.shape_cast %74 : vector<8xf32> to vector<8x1xf32>
    %76 = tpu.reciprocal %75 {approx = true} : vector<8x1xf32> -> vector<8x1xf32>
    %77 = vector.broadcast %76 : vector<8x1xf32> to vector<8x8xf32>
    %78 = arith.mulf %73, %77 : vector<8x8xf32>
    %79 = arith.truncf %78 : vector<8x8xf32> to vector<8x8xbf16>
    %cst_31 = arith.constant dense<0.000000e+00> : vector<8x8xf32>
    %80 = tpu.matmul %79, %67, %cst_31 {dimension_numbers = #tpu.dot_dimension_numbers<[1], [0], [0], [1], [0, 0, 1, 1], [], []>} : vector<8x8xbf16>, vector<8x8xbf16>, vector<8x8xf32> -> vector<8x8xf32>
    %81 = arith.truncf %80 : vector<8x8xf32> to vector<8x8xbf16>
    %c1 = arith.constant 1 : index
    %c0_32 = arith.constant 0 : index
    %c0_33 = arith.constant 0 : index
    %82 = vector.load %arg7[%c1, %c0_32, %c0_33] : memref<4x8x32xbf16, #tpu.memory_space<vmem>>, vector<1x8x32xbf16>
    %83 = vector.shape_cast %82 : vector<1x8x32xbf16> to vector<8x32xbf16>
    %cst_34 = arith.constant dense<0.000000e+00> : vector<8x32xf32>
    %84 = tpu.matmul %81, %83, %cst_34 {dimension_numbers = #tpu.dot_dimension_numbers<[1], [0], [0], [1], [0, 0, 1, 1], [], []>} : vector<8x8xbf16>, vector<8x32xbf16>, vector<8x32xf32> -> vector<8x32xf32>
    %85 = arith.addf %61, %84 : vector<8x32xf32>
    %86 = vector.extract_strided_slice %32 {offsets = [0, 16], sizes = [8, 8], strides = [1, 1]} : vector<8x32xf32> to vector<8x8xf32>
    %87 = arith.truncf %86 : vector<8x8xf32> to vector<8x8xbf16>
    %88 = vector.extract_strided_slice %34 {offsets = [0, 16], sizes = [8, 8], strides = [1, 1]} : vector<8x32xf32> to vector<8x8xf32>
    %89 = arith.truncf %88 : vector<8x8xf32> to vector<8x8xbf16>
    %90 = vector.extract_strided_slice %36 {offsets = [0, 16], sizes = [8, 8], strides = [1, 1]} : vector<8x32xf32> to vector<8x8xf32>
    %91 = arith.truncf %90 : vector<8x8xf32> to vector<8x8xbf16>
    %cst_35 = arith.constant dense<0.000000e+00> : vector<8x8xf32>
    %92 = tpu.matmul %87, %89, %cst_35 {dimension_numbers = #tpu.dot_dimension_numbers<[1], [1], [0], [0], [0, 0, 1, 0], [], []>} : vector<8x8xbf16>, vector<8x8xbf16>, vector<8x8xf32> -> vector<8x8xf32>
    %cst_36 = arith.constant dense<0xFF800000> : vector<8xf32>
    %93 = vector.multi_reduction <maximumf>, %92, %cst_36 [1] : vector<8x8xf32> to vector<8xf32>
    %94 = vector.shape_cast %93 : vector<8xf32> to vector<8x1xf32>
    %95 = vector.broadcast %94 : vector<8x1xf32> to vector<8x8xf32>
    %96 = arith.subf %92, %95 : vector<8x8xf32>
    %97 = math.exp %96 : vector<8x8xf32>
    %cst_37 = arith.constant dense<0.000000e+00> : vector<8xf32>
    %98 = vector.multi_reduction <add>, %97, %cst_37 [1] : vector<8x8xf32> to vector<8xf32>
    %99 = vector.shape_cast %98 : vector<8xf32> to vector<8x1xf32>
    %100 = tpu.reciprocal %99 {approx = true} : vector<8x1xf32> -> vector<8x1xf32>
    %101 = vector.broadcast %100 : vector<8x1xf32> to vector<8x8xf32>
    %102 = arith.mulf %97, %101 : vector<8x8xf32>
    %103 = arith.truncf %102 : vector<8x8xf32> to vector<8x8xbf16>
    %cst_38 = arith.constant dense<0.000000e+00> : vector<8x8xf32>
    %104 = tpu.matmul %103, %91, %cst_38 {dimension_numbers = #tpu.dot_dimension_numbers<[1], [0], [0], [1], [0, 0, 1, 1], [], []>} : vector<8x8xbf16>, vector<8x8xbf16>, vector<8x8xf32> -> vector<8x8xf32>
    %105 = arith.truncf %104 : vector<8x8xf32> to vector<8x8xbf16>
    %c2 = arith.constant 2 : index
    %c0_39 = arith.constant 0 : index
    %c0_40 = arith.constant 0 : index
    %106 = vector.load %arg7[%c2, %c0_39, %c0_40] : memref<4x8x32xbf16, #tpu.memory_space<vmem>>, vector<1x8x32xbf16>
    %107 = vector.shape_cast %106 : vector<1x8x32xbf16> to vector<8x32xbf16>
    %cst_41 = arith.constant dense<0.000000e+00> : vector<8x32xf32>
    %108 = tpu.matmul %105, %107, %cst_41 {dimension_numbers = #tpu.dot_dimension_numbers<[1], [0], [0], [1], [0, 0, 1, 1], [], []>} : vector<8x8xbf16>, vector<8x32xbf16>, vector<8x32xf32> -> vector<8x32xf32>
    %109 = arith.addf %85, %108 : vector<8x32xf32>
    %110 = vector.extract_strided_slice %32 {offsets = [0, 24], sizes = [8, 8], strides = [1, 1]} : vector<8x32xf32> to vector<8x8xf32>
    %111 = arith.truncf %110 : vector<8x8xf32> to vector<8x8xbf16>
    %112 = vector.extract_strided_slice %34 {offsets = [0, 24], sizes = [8, 8], strides = [1, 1]} : vector<8x32xf32> to vector<8x8xf32>
    %113 = arith.truncf %112 : vector<8x8xf32> to vector<8x8xbf16>
    %114 = vector.extract_strided_slice %36 {offsets = [0, 24], sizes = [8, 8], strides = [1, 1]} : vector<8x32xf32> to vector<8x8xf32>
    %115 = arith.truncf %114 : vector<8x8xf32> to vector<8x8xbf16>
    %cst_42 = arith.constant dense<0.000000e+00> : vector<8x8xf32>
    %116 = tpu.matmul %111, %113, %cst_42 {dimension_numbers = #tpu.dot_dimension_numbers<[1], [1], [0], [0], [0, 0, 1, 0], [], []>} : vector<8x8xbf16>, vector<8x8xbf16>, vector<8x8xf32> -> vector<8x8xf32>
    %cst_43 = arith.constant dense<0xFF800000> : vector<8xf32>
    %117 = vector.multi_reduction <maximumf>, %116, %cst_43 [1] : vector<8x8xf32> to vector<8xf32>
    %118 = vector.shape_cast %117 : vector<8xf32> to vector<8x1xf32>
    %119 = vector.broadcast %118 : vector<8x1xf32> to vector<8x8xf32>
    %120 = arith.subf %116, %119 : vector<8x8xf32>
    %121 = math.exp %120 : vector<8x8xf32>
    %cst_44 = arith.constant dense<0.000000e+00> : vector<8xf32>
    %122 = vector.multi_reduction <add>, %121, %cst_44 [1] : vector<8x8xf32> to vector<8xf32>
    %123 = vector.shape_cast %122 : vector<8xf32> to vector<8x1xf32>
    %124 = tpu.reciprocal %123 {approx = true} : vector<8x1xf32> -> vector<8x1xf32>
    %125 = vector.broadcast %124 : vector<8x1xf32> to vector<8x8xf32>
    %126 = arith.mulf %121, %125 : vector<8x8xf32>
    %127 = arith.truncf %126 : vector<8x8xf32> to vector<8x8xbf16>
    %cst_45 = arith.constant dense<0.000000e+00> : vector<8x8xf32>
    %128 = tpu.matmul %127, %115, %cst_45 {dimension_numbers = #tpu.dot_dimension_numbers<[1], [0], [0], [1], [0, 0, 1, 1], [], []>} : vector<8x8xbf16>, vector<8x8xbf16>, vector<8x8xf32> -> vector<8x8xf32>
    %129 = arith.truncf %128 : vector<8x8xf32> to vector<8x8xbf16>
    %c3 = arith.constant 3 : index
    %c0_46 = arith.constant 0 : index
    %c0_47 = arith.constant 0 : index
    %130 = vector.load %arg7[%c3, %c0_46, %c0_47] : memref<4x8x32xbf16, #tpu.memory_space<vmem>>, vector<1x8x32xbf16>
    %131 = vector.shape_cast %130 : vector<1x8x32xbf16> to vector<8x32xbf16>
    %cst_48 = arith.constant dense<0.000000e+00> : vector<8x32xf32>
    %132 = tpu.matmul %129, %131, %cst_48 {dimension_numbers = #tpu.dot_dimension_numbers<[1], [0], [0], [1], [0, 0, 1, 1], [], []>} : vector<8x8xbf16>, vector<8x32xbf16>, vector<8x32xf32> -> vector<8x32xf32>
    %133 = arith.addf %109, %132 : vector<8x32xf32>
    %c0_49 = arith.constant 0 : index
    %c0_50 = arith.constant 0 : index
    %134 = vector.load %arg8[%c0_49, %c0_50] : memref<1x32xf32, #tpu.memory_space<vmem>>, vector<1x32xf32>
    %135 = vector.shape_cast %134 : vector<1x32xf32> to vector<32xf32>
    %136 = vector.shape_cast %135 : vector<32xf32> to vector<1x32xf32>
    %137 = vector.broadcast %136 : vector<1x32xf32> to vector<8x32xf32>
    %138 = arith.addf %133, %137 : vector<8x32xf32>
    %139 = arith.addf %138, %1 : vector<8x32xf32>
    %c0_51 = arith.constant 0 : index
    %c0_52 = arith.constant 0 : index
    %140 = vector.load %arg9[%c0_51, %c0_52] : memref<1x32xf32, #tpu.memory_space<vmem>>, vector<1x32xf32>
    %141 = vector.shape_cast %140 : vector<1x32xf32> to vector<32xf32>
    %c0_53 = arith.constant 0 : index
    %c0_54 = arith.constant 0 : index
    %142 = vector.load %arg10[%c0_53, %c0_54] : memref<1x32xf32, #tpu.memory_space<vmem>>, vector<1x32xf32>
    %143 = vector.shape_cast %142 : vector<1x32xf32> to vector<32xf32>
    %cst_55 = arith.constant dense<0.000000e+00> : vector<8xf32>
    %144 = vector.multi_reduction <add>, %139, %cst_55 [1] : vector<8x32xf32> to vector<8xf32>
    %145 = vector.shape_cast %144 : vector<8xf32> to vector<8x1xf32>
    %cst_56 = arith.constant 3.200000e+01 : f32
    %146 = vector.broadcast %cst_56 : f32 to vector<8x1xf32>
    %147 = arith.divf %145, %146 : vector<8x1xf32>
    %148 = vector.broadcast %147 : vector<8x1xf32> to vector<8x32xf32>
    %149 = arith.subf %139, %148 : vector<8x32xf32>
    %150 = arith.mulf %149, %149 : vector<8x32xf32>
    %cst_57 = arith.constant dense<0.000000e+00> : vector<8xf32>
    %151 = vector.multi_reduction <add>, %150, %cst_57 [1] : vector<8x32xf32> to vector<8xf32>
    %152 = vector.shape_cast %151 : vector<8xf32> to vector<8x1xf32>
    %cst_58 = arith.constant 3.200000e+01 : f32
    %153 = vector.broadcast %cst_58 : f32 to vector<8x1xf32>
    %154 = arith.divf %152, %153 : vector<8x1xf32>
    %155 = vector.broadcast %147 : vector<8x1xf32> to vector<8x32xf32>
    %156 = arith.subf %139, %155 : vector<8x32xf32>
    %cst_59 = arith.constant 9.99999974E-6 : f32
    %157 = vector.broadcast %cst_59 : f32 to vector<8x1xf32>
    %158 = arith.addf %154, %157 : vector<8x1xf32>
    %159 = math.rsqrt %158 : vector<8x1xf32>
    %160 = vector.broadcast %159 : vector<8x1xf32> to vector<8x32xf32>
    %161 = arith.mulf %156, %160 : vector<8x32xf32>
    %162 = vector.shape_cast %141 : vector<32xf32> to vector<1x32xf32>
    %163 = vector.broadcast %162 : vector<1x32xf32> to vector<8x32xf32>
    %164 = arith.mulf %161, %163 : vector<8x32xf32>
    %165 = vector.shape_cast %143 : vector<32xf32> to vector<1x32xf32>
    %166 = vector.broadcast %165 : vector<1x32xf32> to vector<8x32xf32>
    %167 = arith.addf %164, %166 : vector<8x32xf32>
    %168 = arith.truncf %167 : vector<8x32xf32> to vector<8x32xbf16>
    %c0_60 = arith.constant 0 : index
    %c0_61 = arith.constant 0 : index
    %169 = vector.load %arg11[%c0_60, %c0_61] : memref<32x128xbf16, #tpu.memory_space<vmem>>, vector<32x128xbf16>
    %cst_62 = arith.constant dense<0.000000e+00> : vector<8x128xf32>
    %170 = tpu.matmul %168, %169, %cst_62 {dimension_numbers = #tpu.dot_dimension_numbers<[1], [0], [0], [1], [0, 0, 1, 1], [], []>} : vector<8x32xbf16>, vector<32x128xbf16>, vector<8x128xf32> -> vector<8x128xf32>
    %c0_63 = arith.constant 0 : index
    %c0_64 = arith.constant 0 : index
    %171 = vector.load %arg12[%c0_63, %c0_64] : memref<1x128xf32, #tpu.memory_space<vmem>>, vector<1x128xf32>
    %172 = vector.shape_cast %171 : vector<1x128xf32> to vector<128xf32>
    %173 = vector.shape_cast %172 : vector<128xf32> to vector<1x128xf32>
    %174 = vector.broadcast %173 : vector<1x128xf32> to vector<8x128xf32>
    %175 = arith.addf %170, %174 : vector<8x128xf32>
    %cst_65 = arith.constant 5.000000e-01 : f32
    %176 = vector.broadcast %cst_65 : f32 to vector<8x128xf32>
    %177 = arith.mulf %176, %175 : vector<8x128xf32>
    %cst_66 = arith.constant 2.000000e+00 : f32
    %178 = math.sqrt %cst_66 : f32
    %cst_67 = arith.constant 1.000000e+00 : f32
    %179 = arith.divf %cst_67, %178 : f32
    %180 = vector.broadcast %179 : f32 to vector<8x128xf32>
    %181 = arith.mulf %175, %180 : vector<8x128xf32>
    %182 = math.erf %181 : vector<8x128xf32>
    %cst_68 = arith.constant 1.000000e+00 : f32
    %183 = vector.broadcast %cst_68 : f32 to vector<8x128xf32>
    %184 = arith.addf %183, %182 : vector<8x128xf32>
    %185 = arith.mulf %177, %184 : vector<8x128xf32>
    %186 = arith.truncf %185 : vector<8x128xf32> to vector<8x128xbf16>
    %c0_69 = arith.constant 0 : index
    %c0_70 = arith.constant 0 : index
    %187 = vector.load %arg13[%c0_69, %c0_70] : memref<128x32xbf16, #tpu.memory_space<vmem>>, vector<128x32xbf16>
    %cst_71 = arith.constant dense<0.000000e+00> : vector<8x32xf32>
    %188 = tpu.matmul %186, %187, %cst_71 {dimension_numbers = #tpu.dot_dimension_numbers<[1], [0], [0], [1], [0, 0, 1, 1], [], []>} : vector<8x128xbf16>, vector<128x32xbf16>, vector<8x32xf32> -> vector<8x32xf32>
    %c0_72 = arith.constant 0 : index
    %c0_73 = arith.constant 0 : index
    %189 = vector.load %arg14[%c0_72, %c0_73] : memref<1x32xf32, #tpu.memory_space<vmem>>, vector<1x32xf32>
    %190 = vector.shape_cast %189 : vector<1x32xf32> to vector<32xf32>
    %191 = vector.shape_cast %190 : vector<32xf32> to vector<1x32xf32>
    %192 = vector.broadcast %191 : vector<1x32xf32> to vector<8x32xf32>
    %193 = arith.addf %188, %192 : vector<8x32xf32>
    %194 = arith.addf %139, %193 : vector<8x32xf32>
    %c0_74 = arith.constant 0 : index
    %c0_75 = arith.constant 0 : index
    %c0_76 = arith.constant 0 : index
    %195 = vector.load %arg15[%c0_74, %c0_75, %c0_76] : memref<1x8x32xf32, #tpu.memory_space<vmem>>, vector<1x8x32xf32>
    %196 = vector.shape_cast %195 : vector<1x8x32xf32> to vector<8x32xf32>
    %197 = vector.shape_cast %194 : vector<8x32xf32> to vector<1x8x32xf32>
    tpu.vector_store %arg15[%c0_74, %c0_75, %c0_76], %197 {strides = array<i32>} : memref<1x8x32xf32, #tpu.memory_space<vmem>>, vector<1x8x32xf32>,
    return
  }
  func.func @transform_0(%arg0: i32) -> (i32, i32, i32) {
    %c0_i32 = arith.constant 0 : i32
    %c0_i32_0 = arith.constant 0 : i32
    %c0_i32_1 = arith.constant 0 : i32
    return %arg0, %c0_i32, %c0_i32_0 : i32, i32, i32
  }
  func.func @transform_1(%arg0: i32) -> (i32, i32) {
    %c0_i32 = arith.constant 0 : i32
    %c0_i32_0 = arith.constant 0 : i32
    %c0_i32_1 = arith.constant 0 : i32
    return %c0_i32, %c0_i32_0 : i32, i32
  }
  func.func @transform_2(%arg0: i32) -> (i32, i32) {
    %c0_i32 = arith.constant 0 : i32
    %c0_i32_0 = arith.constant 0 : i32
    %c0_i32_1 = arith.constant 0 : i32
    return %c0_i32, %c0_i32_0 : i32, i32
  }
  func.func @transform_3(%arg0: i32) -> (i32, i32) {
    %c0_i32 = arith.constant 0 : i32
    %c0_i32_0 = arith.constant 0 : i32
    %c0_i32_1 = arith.constant 0 : i32
    return %c0_i32, %c0_i32_0 : i32, i32
  }
  func.func @transform_4(%arg0: i32) -> (i32, i32) {
    %c0_i32 = arith.constant 0 : i32
    %c0_i32_0 = arith.constant 0 : i32
    %c0_i32_1 = arith.constant 0 : i32
    return %c0_i32, %c0_i32_0 : i32, i32
  }
  func.func @transform_5(%arg0: i32) -> (i32, i32) {
    %c0_i32 = arith.constant 0 : i32
    %c0_i32_0 = arith.constant 0 : i32
    %c0_i32_1 = arith.constant 0 : i32
    return %c0_i32, %c0_i32_0 : i32, i32
  }
  func.func @transform_6(%arg0: i32) -> (i32, i32, i32) {
    %c0_i32 = arith.constant 0 : i32
    %c0_i32_0 = arith.constant 0 : i32
    %c0_i32_1 = arith.constant 0 : i32
    %c0_i32_2 = arith.constant 0 : i32
    return %c0_i32, %c0_i32_0, %c0_i32_1 : i32, i32, i32
  }
  func.func @transform_7(%arg0: i32) -> (i32, i32) {
    %c0_i32 = arith.constant 0 : i32
    %c0_i32_0 = arith.constant 0 : i32
    %c0_i32_1 = arith.constant 0 : i32
    return %c0_i32, %c0_i32_0 : i32, i32
  }
  func.func @transform_8(%arg0: i32) -> (i32, i32) {
    %c0_i32 = arith.constant 0 : i32
    %c0_i32_0 = arith.constant 0 : i32
    %c0_i32_1 = arith.constant 0 : i32
    return %c0_i32, %c0_i32_0 : i32, i32
  }
  func.func @transform_9(%arg0: i32) -> (i32, i32) {
    %c0_i32 = arith.constant 0 : i32
    %c0_i32_0 = arith.constant 0 : i32
    %c0_i32_1 = arith.constant 0 : i32
    return %c0_i32, %c0_i32_0 : i32, i32
  }
  func.func @transform_10(%arg0: i32) -> (i32, i32) {
    %c0_i32 = arith.constant 0 : i32
    %c0_i32_0 = arith.constant 0 : i32
    %c0_i32_1 = arith.constant 0 : i32
    return %c0_i32, %c0_i32_0 : i32, i32
  }
  func.func @transform_11(%arg0: i32) -> (i32, i32) {
    %c0_i32 = arith.constant 0 : i32
    %c0_i32_0 = arith.constant 0 : i32
    %c0_i32_1 = arith.constant 0 : i32
    return %c0_i32, %c0_i32_0 : i32, i32
  }
  func.func @transform_12(%arg0: i32) -> (i32, i32) {
    %c0_i32 = arith.constant 0 : i32
    %c0_i32_0 = arith.constant 0 : i32
    %c0_i32_1 = arith.constant 0 : i32
    return %c0_i32, %c0_i32_0 : i32, i32
  }
  func.func @transform_13(%arg0: i32) -> (i32, i32) {
    %c0_i32 = arith.constant 0 : i32
    %c0_i32_0 = arith.constant 0 : i32
    %c0_i32_1 = arith.constant 0 : i32
    return %c0_i32, %c0_i32_0 : i32, i32
  }
  func.func @transform_14(%arg0: i32) -> (i32, i32, i32) {
    %c0_i32 = arith.constant 0 : i32
    %c0_i32_0 = arith.constant 0 : i32
    %c0_i32_1 = arith.constant 0 : i32
    return %arg0, %c0_i32, %c0_i32_0 : i32, i32, i32
  }
}

</mosaic_0001>

<llo_original>
// kernel: tpu_custom_call.1
$region0: #{tpu_custom_call.1}
  #allocation0 [shape = 'u32[]', space=smem, size = 0x4, offset = 0x4, fixed_abs, tag = 'smem constant byte address 0x4 - core index']
  #allocation1 [shape = 'u32[144,128]{1,0:T(1,128)}', space=vmem, size = 0x12000, scoped, tag = 'internal scratch']
  %s0 = inlined_call_operand.vmem [shape: f32[2,8,32], index: 0, kind: input, shape index: {}]
  %s1 = inlined_call_operand.vmem [shape: f32[1,32], index: 1, kind: input, shape index: {}]
  %s2 = inlined_call_operand.vmem [shape: f32[1,32], index: 2, kind: input, shape index: {}]
  %s3 = inlined_call_operand.vmem [shape: bf16[32,32], index: 3, kind: input, shape index: {}]
  %s4 = inlined_call_operand.vmem [shape: bf16[32,32], index: 4, kind: input, shape index: {}]
  %s5 = inlined_call_operand.vmem [shape: bf16[32,32], index: 5, kind: input, shape index: {}]
  %s6 = inlined_call_operand.vmem [shape: bf16[4,8,32], index: 6, kind: input, shape index: {}]
  %s7 = inlined_call_operand.hbm [shape: f32[1,32], index: 7, kind: input, shape index: {}]
  %s8 = inlined_call_operand.hbm [shape: f32[1,32], index: 8, kind: input, shape index: {}]
  %s9 = inlined_call_operand.hbm [shape: f32[1,32], index: 9, kind: input, shape index: {}]
  %s10 = inlined_call_operand.vmem [shape: bf16[32,128], index: 10, kind: input, shape index: {}]
  %s11 = inlined_call_operand.vmem [shape: f32[1,128], index: 11, kind: input, shape index: {}]
  %s12 = inlined_call_operand.vmem [shape: bf16[128,32], index: 12, kind: input, shape index: {}]
  %s13 = inlined_call_operand.vmem [shape: f32[1,32], index: 13, kind: input, shape index: {}]
  %s14 = inlined_call_operand.hbm [shape: f32[2,8,32], index: 14, kind: output, shape index: {}]
  %s15 = sld [smem:[#allocation0]]
  $region101: #{tpu_custom_call.1} parent=0
    _
  %s17 = ssub.s32 1, %s15
  %s18 = scalar_select 0, %s17, %s15
  $region1: #{tpu_custom_call.1} parent=0
    #allocation2 [shape = 'u8[512]{0}', space=vmem, size = 0x400, scoped, tag = 'input window, operand 7, single buffered']
    #allocation3 [shape = 's32[2]{0}', space=sflag, size = 0x8, scoped, tag = 'scoped memory for tpu_custom_call.1']
    #allocation4 [shape = 's32[2]{0}', space=sflag, size = 0x8, scoped, tag = 'scoped memory for tpu_custom_call.1']
    #allocation5 [shape = 'u8[512]{0}', space=vmem, size = 0x400, scoped, tag = 'input window, operand 8, single buffered']
    #allocation6 [shape = 's32[1]{0}', space=sflag, size = 0x4, scoped, tag = 'scoped memory for tpu_custom_call.1']
    #allocation7 [shape = 'u8[512]{0}', space=vmem, size = 0x400, scoped, tag = 'input window, operand 9, single buffered']
    #allocation8 [shape = 'u8[8192]{0}', space=vmem, size = 0x2000, scoped, tag = 'output window, operand 0']
    %19 = vsyncpa [#allocation3], 0
    %20 = vsyncpa [#allocation6], 0
    %21 = vsyncpa [#allocation4], 0
    %s22 = scalar_lea.sflag [#allocation4], 1
    %23 = vsyncpa %s22, 0
    loop: start=0, step=1, limit=4
    $region2: #{tpu_custom_call.1} parent=1 // loop_pre_header
      _
    $region3: #{tpu_custom_call.1} parent=1 // loop_header
      %s25 = sphi 0, %s29
      %p26 = scmp.ge.s32.totalorder %s25, 4
      %s35 = sphi 0, %s37
      %s38 = sphi 0, %s35
      %s39 = sphi 0, %s38
      %s55 = sphi 0, %s39
      %s59 = sphi 0, %s59
      %s61 = sphi 0, %s59
      %s62 = sphi 0, %s61
      %s76 = sphi 0, %s62
      %s80 = sphi 0, %s80
      %s82 = sphi 0, %s80
      %s83 = sphi 0, %s82
      %s97 = sphi 0, %s83
      %s101 = sphi 0, %s101
      %s103 = sphi 0, %s101
      %s104 = sphi 0, %s103
      %s118 = sphi 0, %s104
      %s122 = sphi 0, %s122
      %s124 = sphi 0, %s122
      %s125 = sphi 0, %s124
      %s139 = sphi 0, %s125
      %s143 = sphi 0, %s143
      %s145 = sphi 0, %s143
      %s146 = sphi 0, %s145
      %s160 = sphi 0, %s146
      %s164 = sphi 0, %s164
      %s166 = sphi 0, %s164
      %s167 = sphi 0, %s166
      %s181 = sphi 0, %s167
      %s185 = sphi 0, %s185
      %s187 = sphi 0, %s185
      %s188 = sphi 0, %s187
      %s202 = sphi 0, %s188
      %s206 = sphi 0, %s206
      %s208 = sphi 0, %s206
      %s209 = sphi 0, %s208
      %s223 = sphi 0, %s209
      %s227 = sphi 0, %s227
      %s229 = sphi 0, %s227
      %s230 = sphi 0, %s229
      %s244 = sphi 0, %s230
      %s248 = sphi 0, %s248
      %s250 = sphi 0, %s248
      %s251 = sphi 0, %s250
      %s265 = sphi 0, %s251
      %s269 = sphi 0, %s269
      %s271 = sphi 0, %s269
      %s272 = sphi 0, %s271
      %s286 = sphi 0, %s272
      %s290 = sphi 0, %s290
      %s292 = sphi 0, %s290
      %s293 = sphi 0, %s292
      %s307 = sphi 0, %s293
      %s311 = sphi 0, %s311
      %s313 = sphi 0, %s311
      %s314 = sphi 0, %s313
      %s328 = sphi 0, %s314
      %s334 = sphi 0, %s336
      %s337 = sphi 0, %s334
      %s338 = sphi 0, %s337
      %s354 = sphi 0, %s338
    $region4: #{tpu_custom_call.1} parent=1 // loop_header_branch
      %28 = sbr.rel (%p26) target = $region8
    $region5: #{tpu_custom_call.1} parent=1 // loop_body
      %s30 = ssub.s32 %s25, 1
      %s31 = ssub.s32 %s25, 2
      %s32 = sadd.s32 %s25, 1
      %s33 = ssub.s32 %s25, %s32
      %p34 = scmp.eq.s32.totalorder %s33, 0
      %s36 = sadd.s32 %s35, 1
      %s37 = scalar_select %p34, %s35, %s36
      %p40 = pneg %p34
      %p41 = scmp.eq.s32.totalorder %s25, 1
      %p42 = por %p40, %p41
      %p43 = scmp.ne.s32.totalorder %s35, %s38
      %p44 = scmp.eq.s32.totalorder %s25, 0
      %p45 = por %p43, %p44
      %p46 = scmp.ne.s32.totalorder %s35, %s38
      %p47 = scmp.eq.s32.totalorder %s30, 1
      %p48 = por %p46, %p47
      %p49 = scmp.ne.s32.totalorder %s38, %s39
      %p50 = scmp.eq.s32.totalorder %s30, 0
      %p51 = por %p49, %p50
      %p52 = scmp.ne.s32.totalorder %s38, %s39
      %p53 = scmp.eq.s32.totalorder %s31, 1
      %p54 = por %p52, %p53
      %p56 = scmp.ne.s32.totalorder %s39, %s55
      %p57 = scmp.eq.s32.totalorder %s31, 0
      %p58 = por %p56, %p57
      %s60 = sadd.s32 %s59, 1
      %p63 = scmp.eq.s32.totalorder %s25, 1
      %p64 = scmp.ne.s32.totalorder %s59, %s61
      %p65 = scmp.eq.s32.totalorder %s25, 0
      %p66 = por %p64, %p65
      %p67 = scmp.ne.s32.totalorder %s59, %s61
      %p68 = scmp.eq.s32.totalorder %s30, 1
      %p69 = por %p67, %p68
      %p70 = scmp.ne.s32.totalorder %s61, %s62
      %p71 = scmp.eq.s32.totalorder %s30, 0
      %p72 = por %p70, %p71
      %p73 = scmp.ne.s32.totalorder %s61, %s62
      %p74 = scmp.eq.s32.totalorder %s31, 1
      %p75 = por %p73, %p74
      %p77 = scmp.ne.s32.totalorder %s62, %s76
      %p78 = scmp.eq.s32.totalorder %s31, 0
      %p79 = por %p77, %p78
      %s81 = sadd.s32 %s80, 1
      %p84 = scmp.eq.s32.totalorder %s25, 1
      %p85 = scmp.ne.s32.totalorder %s80, %s82
      %p86 = scmp.eq.s32.totalorder %s25, 0
      %p87 = por %p85, %p86
      %p88 = scmp.ne.s32.totalorder %s80, %s82
      %p89 = scmp.eq.s32.totalorder %s30, 1
      %p90 = por %p88, %p89
      %p91 = scmp.ne.s32.totalorder %s82, %s83
      %p92 = scmp.eq.s32.totalorder %s30, 0
      %p93 = por %p91, %p92
      %p94 = scmp.ne.s32.totalorder %s82, %s83
      %p95 = scmp.eq.s32.totalorder %s31, 1
      %p96 = por %p94, %p95
      %p98 = scmp.ne.s32.totalorder %s83, %s97
      %p99 = scmp.eq.s32.totalorder %s31, 0
      %p100 = por %p98, %p99
      %s102 = sadd.s32 %s101, 1
      %p105 = scmp.eq.s32.totalorder %s25, 1
      %p106 = scmp.ne.s32.totalorder %s101, %s103
      %p107 = scmp.eq.s32.totalorder %s25, 0
      %p108 = por %p106, %p107
      %p109 = scmp.ne.s32.totalorder %s101, %s103
      %p110 = scmp.eq.s32.totalorder %s30, 1
      %p111 = por %p109, %p110
      %p112 = scmp.ne.s32.totalorder %s103, %s104
      %p113 = scmp.eq.s32.totalorder %s30, 0
      %p114 = por %p112, %p113
      %p115 = scmp.ne.s32.totalorder %s103, %s104
      %p116 = scmp.eq.s32.totalorder %s31, 1
      %p117 = por %p115, %p116
      %p119 = scmp.ne.s32.totalorder %s104, %s118
      %p120 = scmp.eq.s32.totalorder %s31, 0
      %p121 = por %p119, %p120
      %s123 = sadd.s32 %s122, 1
      %p126 = scmp.eq.s32.totalorder %s25, 1
      %p127 = scmp.ne.s32.totalorder %s122, %s124
      %p128 = scmp.eq.s32.totalorder %s25, 0
      %p129 = por %p127, %p128
      %p130 = scmp.ne.s32.totalorder %s122, %s124
      %p131 = scmp.eq.s32.totalorder %s30, 1
      %p132 = por %p130, %p131
      %p133 = scmp.ne.s32.totalorder %s124, %s125
      %p134 = scmp.eq.s32.totalorder %s30, 0
      %p135 = por %p133, %p134
      %p136 = scmp.ne.s32.totalorder %s124, %s125
      %p137 = scmp.eq.s32.totalorder %s31, 1
      %p138 = por %p136, %p137
      %p140 = scmp.ne.s32.totalorder %s125, %s139
      %p141 = scmp.eq.s32.totalorder %s31, 0
      %p142 = por %p140, %p141
      %s144 = sadd.s32 %s143, 1
      %p147 = scmp.eq.s32.totalorder %s25, 1
      %p148 = scmp.ne.s32.totalorder %s143, %s145
      %p149 = scmp.eq.s32.totalorder %s25, 0
      %p150 = por %p148, %p149
      %p151 = scmp.ne.s32.totalorder %s143, %s145
      %p152 = scmp.eq.s32.totalorder %s30, 1
      %p153 = por %p151, %p152
      %p154 = scmp.ne.s32.totalorder %s145, %s146
      %p155 = scmp.eq.s32.totalorder %s30, 0
      %p156 = por %p154, %p155
      %p157 = scmp.ne.s32.totalorder %s145, %s146
      %p158 = scmp.eq.s32.totalorder %s31, 1
      %p159 = por %p157, %p158
      %p161 = scmp.ne.s32.totalorder %s146, %s160
      %p162 = scmp.eq.s32.totalorder %s31, 0
      %p163 = por %p161, %p162
      %s165 = sadd.s32 %s164, 1
      %p168 = scmp.eq.s32.totalorder %s25, 1
      %p169 = scmp.ne.s32.totalorder %s164, %s166
      %p170 = scmp.eq.s32.totalorder %s25, 0
      %p171 = por %p169, %p170
      %p172 = scmp.ne.s32.totalorder %s164, %s166
      %p173 = scmp.eq.s32.totalorder %s30, 1
      %p174 = por %p172, %p173
      %p175 = scmp.ne.s32.totalorder %s166, %s167
      %p176 = scmp.eq.s32.totalorder %s30, 0
      %p177 = por %p175, %p176
      %p178 = scmp.ne.s32.totalorder %s166, %s167
      %p179 = scmp.eq.s32.totalorder %s31, 1
      %p180 = por %p178, %p179
      %p182 = scmp.ne.s32.totalorder %s167, %s181
      %p183 = scmp.eq.s32.totalorder %s31, 0
      %p184 = por %p182, %p183
      %s186 = sadd.s32 %s185, 1
      %p189 = scmp.eq.s32.totalorder %s25, 1
      %p190 = scmp.ne.s32.totalorder %s185, %s187
      %p191 = scmp.eq.s32.totalorder %s25, 0
      %p192 = por %p190, %p191
      %p193 = scmp.ne.s32.totalorder %s185, %s187
      %p194 = scmp.eq.s32.totalorder %s30, 1
      %p195 = por %p193, %p194
      %p196 = scmp.ne.s32.totalorder %s187, %s188
      %p197 = scmp.eq.s32.totalorder %s30, 0
      %p198 = por %p196, %p197
      %p199 = scmp.ne.s32.totalorder %s187, %s188
      %p200 = scmp.eq.s32.totalorder %s31, 1
      %p201 = por %p199, %p200
      %p203 = scmp.ne.s32.totalorder %s188, %s202
      %p204 = scmp.eq.s32.totalorder %s31, 0
      %p205 = por %p203, %p204
      %s207 = sadd.s32 %s206, 1
      %p210 = scmp.eq.s32.totalorder %s25, 1
      %p211 = scmp.ne.s32.totalorder %s206, %s208
      %p212 = scmp.eq.s32.totalorder %s25, 0
      %p213 = por %p211, %p212
      %p214 = scmp.ne.s32.totalorder %s206, %s208
      %p215 = scmp.eq.s32.totalorder %s30, 1
      %p216 = por %p214, %p215
      %p217 = scmp.ne.s32.totalorder %s208, %s209
      %p218 = scmp.eq.s32.totalorder %s30, 0
      %p219 = por %p217, %p218
      %p220 = scmp.ne.s32.totalorder %s208, %s209
      %p221 = scmp.eq.s32.totalorder %s31, 1
      %p222 = por %p220, %p221
      %p224 = scmp.ne.s32.totalorder %s209, %s223
      %p225 = scmp.eq.s32.totalorder %s31, 0
      %p226 = por %p224, %p225
      %s228 = sadd.s32 %s227, 1
      %p231 = scmp.eq.s32.totalorder %s25, 1
      %p232 = scmp.ne.s32.totalorder %s227, %s229
      %p233 = scmp.eq.s32.totalorder %s25, 0
      %p234 = por %p232, %p233
      %p235 = scmp.ne.s32.totalorder %s227, %s229
      %p236 = scmp.eq.s32.totalorder %s30, 1
      %p237 = por %p235, %p236
      %p238 = scmp.ne.s32.totalorder %s229, %s230
      %p239 = scmp.eq.s32.totalorder %s30, 0
      %p240 = por %p238, %p239
      %p241 = scmp.ne.s32.totalorder %s229, %s230
      %p242 = scmp.eq.s32.totalorder %s31, 1
      %p243 = por %p241, %p242
      %p245 = scmp.ne.s32.totalorder %s230, %s244
      %p246 = scmp.eq.s32.totalorder %s31, 0
      %p247 = por %p245, %p246
      %s249 = sadd.s32 %s248, 1
      %p252 = scmp.eq.s32.totalorder %s25, 1
      %p253 = scmp.ne.s32.totalorder %s248, %s250
      %p254 = scmp.eq.s32.totalorder %s25, 0
      %p255 = por %p253, %p254
      %p256 = scmp.ne.s32.totalorder %s248, %s250
      %p257 = scmp.eq.s32.totalorder %s30, 1
      %p258 = por %p256, %p257
      %p259 = scmp.ne.s32.totalorder %s250, %s251
      %p260 = scmp.eq.s32.totalorder %s30, 0
      %p261 = por %p259, %p260
      %p262 = scmp.ne.s32.totalorder %s250, %s251
      %p263 = scmp.eq.s32.totalorder %s31, 1
      %p264 = por %p262, %p263
      %p266 = scmp.ne.s32.totalorder %s251, %s265
      %p267 = scmp.eq.s32.totalorder %s31, 0
      %p268 = por %p266, %p267
      %s270 = sadd.s32 %s269, 1
      %p273 = scmp.eq.s32.totalorder %s25, 1
      %p274 = scmp.ne.s32.totalorder %s269, %s271
      %p275 = scmp.eq.s32.totalorder %s25, 0
      %p276 = por %p274, %p275
      %p277 = scmp.ne.s32.totalorder %s269, %s271
      %p278 = scmp.eq.s32.totalorder %s30, 1
      %p279 = por %p277, %p278
      %p280 = scmp.ne.s32.totalorder %s271, %s272
      %p281 = scmp.eq.s32.totalorder %s30, 0
      %p282 = por %p280, %p281
      %p283 = scmp.ne.s32.totalorder %s271, %s272
      %p284 = scmp.eq.s32.totalorder %s31, 1
      %p285 = por %p283, %p284
      %p287 = scmp.ne.s32.totalorder %s272, %s286
      %p288 = scmp.eq.s32.totalorder %s31, 0
      %p289 = por %p287, %p288
      %s291 = sadd.s32 %s290, 1
      %p294 = scmp.eq.s32.totalorder %s25, 1
      %p295 = scmp.ne.s32.totalorder %s290, %s292
      %p296 = scmp.eq.s32.totalorder %s25, 0
      %p297 = por %p295, %p296
      %p298 = scmp.ne.s32.totalorder %s290, %s292
      %p299 = scmp.eq.s32.totalorder %s30, 1
      %p300 = por %p298, %p299
      %p301 = scmp.ne.s32.totalorder %s292, %s293
      %p302 = scmp.eq.s32.totalorder %s30, 0
      %p303 = por %p301, %p302
      %p304 = scmp.ne.s32.totalorder %s292, %s293
      %p305 = scmp.eq.s32.totalorder %s31, 1
      %p306 = por %p304, %p305
      %p308 = scmp.ne.s32.totalorder %s293, %s307
      %p309 = scmp.eq.s32.totalorder %s31, 0
      %p310 = por %p308, %p309
      %s312 = sadd.s32 %s311, 1
      %p315 = scmp.eq.s32.totalorder %s25, 1
      %p316 = scmp.ne.s32.totalorder %s311, %s313
      %p317 = scmp.eq.s32.totalorder %s25, 0
      %p318 = por %p316, %p317
      %p319 = scmp.ne.s32.totalorder %s311, %s313
      %p320 = scmp.eq.s32.totalorder %s30, 1
      %p321 = por %p319, %p320
      %p322 = scmp.ne.s32.totalorder %s313, %s314
      %p323 = scmp.eq.s32.totalorder %s30, 0
      %p324 = por %p322, %p323
      %p325 = scmp.ne.s32.totalorder %s313, %s314
      %p326 = scmp.eq.s32.totalorder %s31, 1
      %p327 = por %p325, %p326
      %p329 = scmp.ne.s32.totalorder %s314, %s328
      %p330 = scmp.eq.s32.totalorder %s31, 0
      %p331 = por %p329, %p330
      %s332 = ssub.s32 %s25, %s32
      %p333 = scmp.eq.s32.totalorder %s332, 0
      %s335 = sadd.s32 %s334, 1
      %s336 = scalar_select %p333, %s334, %s335
      %p339 = pneg %p333
      %p340 = scmp.eq.s32.totalorder %s25, 1
      %p341 = por %p339, %p340
      %p342 = scmp.ne.s32.totalorder %s334, %s337
      %p343 = scmp.eq.s32.totalorder %s25, 0
      %p344 = por %p342, %p343
      %p345 = scmp.ne.s32.totalorder %s334, %s337
      %p346 = scmp.eq.s32.totalorder %s30, 1
      %p347 = por %p345, %p346
      %p348 = scmp.ne.s32.totalorder %s337, %s338
      %p349 = scmp.eq.s32.totalorder %s30, 0
      %p350 = por %p348, %p349
      %p351 = scmp.ne.s32.totalorder %s337, %s338
      %p352 = scmp.eq.s32.totalorder %s31, 1
      %p353 = por %p351, %p352
      %p355 = scmp.ne.s32.totalorder %s338, %s354
      %p356 = scmp.eq.s32.totalorder %s31, 0
      %p357 = por %p355, %p356
      %p358 = scmp.le.s32.totalorder 1, %s25
      %p359 = scmp.lt.s32.totalorder %s25, 3
      %p360 = pnand %p358, %p359
      %p361 = pneg %p360
      // Predicated region
      $region9: #{tpu_custom_call.1} parent=5 // pred_check
        _
      $region10: #{tpu_custom_call.1} parent=5 // pred_check_branch
        %363 = sbr.rel (%p360) target = $region12
      $region11: #{tpu_custom_call.1} parent=5 // pred_region
        %s364 = ssub.s32 %s25, 1
        // Predicated region
        $region13: #{tpu_custom_call.1} parent=11 // pred_check
          %p365 = pneg %p72
        $region14: #{tpu_custom_call.1} parent=11 // pred_check_branch
          %367 = sbr.rel (%p365) target = $region16
        $region15: #{tpu_custom_call.1} parent=11 // pred_region
          _
        $region16: #{tpu_custom_call.1} parent=11 // pred_fallthru
          _
        // Predicated region
        $region17: #{tpu_custom_call.1} parent=11 // pred_check
          %p368 = pneg %p93
        $region18: #{tpu_custom_call.1} parent=11 // pred_check_branch
          %370 = sbr.rel (%p368) target = $region20
        $region19: #{tpu_custom_call.1} parent=11 // pred_region
          _
        $region20: #{tpu_custom_call.1} parent=11 // pred_fallthru
          _
        // Predicated region
        $region21: #{tpu_custom_call.1} parent=11 // pred_check
          %p371 = pneg %p114
        $region22: #{tpu_custom_call.1} parent=11 // pred_check_branch
          %373 = sbr.rel (%p371) target = $region24
        $region23: #{tpu_custom_call.1} parent=11 // pred_region
          _
        $region24: #{tpu_custom_call.1} parent=11 // pred_fallthru
          _
        // Predicated region
        $region25: #{tpu_custom_call.1} parent=11 // pred_check
          %p374 = pneg %p135
        $region26: #{tpu_custom_call.1} parent=11 // pred_check_branch
          %376 = sbr.rel (%p374) target = $region28
        $region27: #{tpu_custom_call.1} parent=11 // pred_region
          _
        $region28: #{tpu_custom_call.1} parent=11 // pred_fallthru
          _
        // Predicated region
        $region29: #{tpu_custom_call.1} parent=11 // pred_check
          %p377 = pneg %p156
        $region30: #{tpu_custom_call.1} parent=11 // pred_check_branch
          %379 = sbr.rel (%p377) target = $region32
        $region31: #{tpu_custom_call.1} parent=11 // pred_region
          _
        $region32: #{tpu_custom_call.1} parent=11 // pred_fallthru
          _
        // Predicated region
        $region33: #{tpu_custom_call.1} parent=11 // pred_check
          %p380 = pneg %p177
        $region34: #{tpu_custom_call.1} parent=11 // pred_check_branch
          %382 = sbr.rel (%p380) target = $region36
        $region35: #{tpu_custom_call.1} parent=11 // pred_region
          _
        $region36: #{tpu_custom_call.1} parent=11 // pred_fallthru
          _
        // Predicated region
        $region37: #{tpu_custom_call.1} parent=11 // pred_check
          %p383 = pneg %p198
        $region38: #{tpu_custom_call.1} parent=11 // pred_check_branch
          %385 = sbr.rel (%p383) target = $region40
        $region39: #{tpu_custom_call.1} parent=11 // pred_region
          %s387 = ssub.s32 16, 16
          %388 = vsyncadd [#allocation3], %s387
          %s390 = sshll.u32 [#allocation2], 4
          %s391 = int_to_ptr.vmem [resolvable:$true] %s390
          %393 = dma.hbm_to_vmem [thread:$0]  %s7, 16, %s391, [#allocation3]
        $region40: #{tpu_custom_call.1} parent=11 // pred_fallthru
          _
        // Predicated region
        $region41: #{tpu_custom_call.1} parent=11 // pred_check
          %p394 = pneg %p219
        $region42: #{tpu_custom_call.1} parent=11 // pred_check_branch
          %396 = sbr.rel (%p394) target = $region44
        $region43: #{tpu_custom_call.1} parent=11 // pred_region
          %s398 = ssub.s32 16, 16
          %399 = vsyncadd [#allocation6], %s398
          %s401 = sshll.u32 [#allocation5], 4
          %s402 = int_to_ptr.vmem [resolvable:$true] %s401
          %404 = dma.hbm_to_vmem [thread:$0]  %s8, 16, %s402, [#allocation6]
        $region44: #{tpu_custom_call.1} parent=11 // pred_fallthru
          _
        // Predicated region
        $region45: #{tpu_custom_call.1} parent=11 // pred_check
          %p405 = pneg %p240
        $region46: #{tpu_custom_call.1} parent=11 // pred_check_branch
          %407 = sbr.rel (%p405) target = $region48
        $region47: #{tpu_custom_call.1} parent=11 // pred_region
          %s409 = ssub.s32 16, 16
          %410 = vsyncadd [#allocation6], %s409
          %s412 = sshll.u32 [#allocation7], 4
          %s413 = int_to_ptr.vmem [resolvable:$true] %s412
          %415 = dma.hbm_to_vmem [thread:$0]  %s9, 16, %s413, [#allocation6]
        $region48: #{tpu_custom_call.1} parent=11 // pred_fallthru
          _
        // Predicated region
        $region49: #{tpu_custom_call.1} parent=11 // pred_check
          %p416 = pneg %p261
        $region50: #{tpu_custom_call.1} parent=11 // pred_check_branch
          %418 = sbr.rel (%p416) target = $region52
        $region51: #{tpu_custom_call.1} parent=11 // pred_region
          _
        $region52: #{tpu_custom_call.1} parent=11 // pred_fallthru
          _
        // Predicated region
        $region53: #{tpu_custom_call.1} parent=11 // pred_check
          %p419 = pneg %p282
        $region54: #{tpu_custom_call.1} parent=11 // pred_check_branch
          %421 = sbr.rel (%p419) target = $region56
        $region55: #{tpu_custom_call.1} parent=11 // pred_region
          _
        $region56: #{tpu_custom_call.1} parent=11 // pred_fallthru
          _
        // Predicated region
        $region57: #{tpu_custom_call.1} parent=11 // pred_check
          %p422 = pneg %p303
        $region58: #{tpu_custom_call.1} parent=11 // pred_check_branch
          %424 = sbr.rel (%p422) target = $region60
        $region59: #{tpu_custom_call.1} parent=11 // pred_region
          _
        $region60: #{tpu_custom_call.1} parent=11 // pred_fallthru
          _
        // Predicated region
        $region61: #{tpu_custom_call.1} parent=11 // pred_check
          %p425 = pneg %p324
        $region62: #{tpu_custom_call.1} parent=11 // pred_check_branch
          %427 = sbr.rel (%p425) target = $region64
        $region63: #{tpu_custom_call.1} parent=11 // pred_region
          _
        $region64: #{tpu_custom_call.1} parent=11 // pred_fallthru
          _
      $region12: #{tpu_custom_call.1} parent=5 // pred_fallthru
        _
      %p428 = scmp.lt.s32.totalorder %s25, 2
      // Predicated region
      $region65: #{tpu_custom_call.1} parent=5 // pred_check
        %p429 = pneg %p428
      $region66: #{tpu_custom_call.1} parent=5 // pred_check_branch
        %431 = sbr.rel (%p429) target = $region68
      $region67: #{tpu_custom_call.1} parent=5 // pred_region
        // Predicated region
        $region69: #{tpu_custom_call.1} parent=67 // pred_check
          %p432 = pneg %p45
        $region70: #{tpu_custom_call.1} parent=67 // pred_check_branch
          %434 = sbr.rel (%p432) target = $region72
        $region71: #{tpu_custom_call.1} parent=67 // pred_region
          %p435 = scmp.lt.s32.totalorder %s25, 1
          %s436 = scalar_select %p435, %s25, 1
          %s437 = smul.addr %s436, 8
          %s438 = scalar_lea.vmem %s0, %s437
        $region72: #{tpu_custom_call.1} parent=67 // pred_fallthru
          _
      $region68: #{tpu_custom_call.1} parent=5 // pred_fallthru
        _
      %p439 = scmp.le.s32.totalorder 1, %s25
      %p440 = scmp.lt.s32.totalorder %s25, 3
      %p441 = pnand %p439, %p440
      %p442 = pneg %p441
      // Predicated region
      $region73: #{tpu_custom_call.1} parent=5 // pred_check
        _
      $region74: #{tpu_custom_call.1} parent=5 // pred_check_branch
        %444 = sbr.rel (%p441) target = $region76
      $region75: #{tpu_custom_call.1} parent=5 // pred_region
        %s445 = ssub.s32 %s25, 1
        // Predicated region
        $region77: #{tpu_custom_call.1} parent=75 // pred_check
          %p446 = pneg %p198
        $region78: #{tpu_custom_call.1} parent=75 // pred_check_branch
          %448 = sbr.rel (%p446) target = $region80
        $region79: #{tpu_custom_call.1} parent=75 // pred_region
          %449 = dma.done [#allocation3], 16
        $region80: #{tpu_custom_call.1} parent=75 // pred_fallthru
          _
        // Predicated region
        $region81: #{tpu_custom_call.1} parent=75 // pred_check
          %p450 = pneg %p219
        $region82: #{tpu_custom_call.1} parent=75 // pred_check_branch
          %452 = sbr.rel (%p450) target = $region84
        $region83: #{tpu_custom_call.1} parent=75 // pred_region
          %453 = dma.done [#allocation6], 16
        $region84: #{tpu_custom_call.1} parent=75 // pred_fallthru
          _
        // Predicated region
        $region85: #{tpu_custom_call.1} parent=75 // pred_check
          %p454 = pneg %p240
        $region86: #{tpu_custom_call.1} parent=75 // pred_check_branch
          %456 = sbr.rel (%p454) target = $region88
        $region87: #{tpu_custom_call.1} parent=75 // pred_region
          %457 = dma.done [#allocation6], 16
        $region88: #{tpu_custom_call.1} parent=75 // pred_fallthru
          _
        %p458 = scmp.lt.s32.totalorder %s30, 1
        %s459 = scalar_select %p458, %s30, 1
        %s460 = smul.addr %s459, 8
        %s461 = scalar_lea.vmem %s0, %s460
        %p462 = pneg %p51
        %p463 = pneg %p48
        %p464 = pneg %p72
        %p465 = pneg %p69
        %p466 = pneg %p93
        %p467 = pneg %p90
        %p468 = pneg %p114
        %p469 = pneg %p111
        %p470 = pneg %p135
        %p471 = pneg %p132
        %p472 = pneg %p156
        %p473 = pneg %p153
        %p474 = pneg %p177
        %p475 = pneg %p174
        %p476 = pneg %p198
        %p477 = pneg %p195
        %p478 = pneg %p219
        %p479 = pneg %p216
        %p480 = pneg %p240
        %p481 = pneg %p237
        %p482 = pneg %p261
        %p483 = pneg %p258
        %p484 = pneg %p282
        %p485 = pneg %p279
        %p486 = pneg %p303
        %p487 = pneg %p300
        %p488 = pneg %p324
        %p489 = pneg %p321
        %p490 = pneg %p350
        %p491 = pneg %p347
        %s492 = sand.u32 %s337, 1
        %s493 = scalar_lea.sflag [#allocation4], %s492
        %s494 = sand.u32 %s337, 1
        %s495 = smul.addr %s494, 8
        %s496 = scalar_lea.vmem [#allocation8], %s495
        %p497 = scmp.lt.s32.totalorder %s30, 1
        %s498 = scalar_select %p497, %s30, 1
        %s499 = smul.addr %s498, 8
        %s500 = scalar_lea.vmem %s0, %s499
        %v502 = vld [vmem:[%s500] sm:$0xff]
        %v503 = vld [vmem:[%s1] sm:$0x1]
        %v504 = vld [vmem:[%s2] sm:$0x1]
        %vm505 = vcmask 261120
        %v506 = vsel %vm505, %v502, 0.0
        %507 = vadd.xlane.f32.xlu0 %v506
        %v508 = vpop.xlane.xlu0 %507
        %v509 = vrcp.pop 32.0
        %v510 = vmul.f32 %v508, %v509
        %v511 = vsub.f32 %v502, %v510
        %v512 = vmul.f32 %v511, %v511
        %v513 = vsel %vm505, %v512, 0.0
        %514 = vadd.xlane.f32.xlu0 %v513
        %v515 = vpop.xlane.xlu0 %514
        %v516 = vmul.f32 %v515, %v509
        %v517 = vadd.f32 %v516, 1e-05
        %v518 = vrsqrt.pop %v517
        %v519 = vmul.f32 %v511, %v518
        %v521 = vlaneseq
        %v522 = vshrl.u32 %v521, 7
        %v523 = vsub.s32 0, %v522
        %v524 = vrot.slane %v503, %v523
        %v526 = vmul.f32 %v519, %v524
        %v528 = vlaneseq
        %v529 = vshrl.u32 %v528, 7
        %v530 = vsub.s32 0, %v529
        %v531 = vrot.slane %v504, %v530
        %v533 = vadd.f32 %v526, %v531
        %v534 = vpack.c.bf16 %v533, %v533
        %v535 = vld [vmem:[%s3] sm:$0xf]
        %v536 = vld [vmem:[%s3 + $0x4] sm:$0xf]
        %v537 = vld [vmem:[%s3 + $0x8] sm:$0xf]
        %v538 = vld [vmem:[%s3 + $0xc] sm:$0xf]
        %v543 = vunpack.c.l.b16 %v535
        %v544 = vunpack.c.l.b16 %v536
        %v545 = vunpack.c.l.b16 %v537
        %v546 = vunpack.c.l.b16 %v538
        %v547 = vpack.c.b16 %v544, %v543
        %v548 = vpack.c.b16 %v546, %v545
        %v552 = vsel %vm505, %v534, 0
        %554 = vmatprep.subr.bf16.mxu0 0
        %555 = vmatpush1.bf16.msra.mxu0 %v547
        %556 = vmatprep.subr.bf16.mxu0 0
        %557 = vmatpush1.bf16.msra.mxu0 %v548
        %558 = vmatprep.subr.bf16.mxu0 0
        %559 = vmatpush1.bf16.msra.mxu0 0
        %560 = vmatprep.subr.bf16.mxu0 0
        %561 = vmatpush1.bf16.msra.mxu0 0
        %562 = vmatprep.subr.bf16.mxu0 0
        %563 = vmatpush1.bf16.msra.mxu0 0
        %564 = vmatprep.subr.bf16.mxu0 0
        %565 = vmatpush1.bf16.msra.mxu0 0
        %566 = vmatprep.subr.bf16.mxu0 0
        %567 = vmatpush1.bf16.msra.mxu0 0
        %568 = vmatprep.subr.bf16.mxu0 0
        %569 = vmatpush1.bf16.msra.mxu0 0
        %570 = vmatprep.subr.bf16.mxu0 0
        %571 = vmatpush1.bf16.msra.mxu0 0
        %572 = vmatprep.subr.bf16.mxu0 0
        %573 = vmatpush1.bf16.msra.mxu0 0
        %574 = vmatprep.subr.bf16.mxu0 0
        %575 = vmatpush1.bf16.msra.mxu0 0
        %576 = vmatprep.subr.bf16.mxu0 0
        %577 = vmatpush1.bf16.msra.mxu0 0
        %578 = vmatprep.subr.bf16.mxu0 0
        %579 = vmatpush1.bf16.msra.mxu0 0
        %580 = vmatprep.subr.bf16.mxu0 0
        %581 = vmatpush1.bf16.msra.mxu0 0
        %582 = vmatprep.subr.bf16.mxu0 0
        %583 = vmatpush1.bf16.msra.mxu0 0
        %584 = vmatprep.subr.bf16.mxu0 0
        %585 = vmatpush1.bf16.msra.mxu0 0
        %586 = vmatprep.mubr.bf16.mxu0 0
        %587 = vmatmul.mubr.bf16.gmra.mrb[0].mxu0 %v552
        %v588 = vpop.f32.mrb[0].mxu0
        %v589 = vadd.f32 0.0, %v588
        %v590 = vpop.f32.mrb[0].mxu0
        %v591 = vpop.f32.mrb[0].mxu0
        %v592 = vpop.f32.mrb[0].mxu0
        %593 = vdwg.mxu0
        %v594 = vld [vmem:[%s4] sm:$0xf]
        %v595 = vld [vmem:[%s4 + $0x4] sm:$0xf]
        %v596 = vld [vmem:[%s4 + $0x8] sm:$0xf]
        %v597 = vld [vmem:[%s4 + $0xc] sm:$0xf]
        %v602 = vunpack.c.l.b16 %v594
        %v603 = vunpack.c.l.b16 %v595
        %v604 = vunpack.c.l.b16 %v596
        %v605 = vunpack.c.l.b16 %v597
        %v606 = vpack.c.b16 %v603, %v602
        %v607 = vpack.c.b16 %v605, %v604
        %610 = vmatprep.subr.bf16.mxu0 0
        %611 = vmatpush1.bf16.msra.mxu0 %v606
        %612 = vmatprep.subr.bf16.mxu0 0
        %613 = vmatpush1.bf16.msra.mxu0 %v607
        %614 = vmatprep.subr.bf16.mxu0 0
        %615 = vmatpush1.bf16.msra.mxu0 0
        %616 = vmatprep.subr.bf16.mxu0 0
        %617 = vmatpush1.bf16.msra.mxu0 0
        %618 = vmatprep.subr.bf16.mxu0 0
        %619 = vmatpush1.bf16.msra.mxu0 0
        %620 = vmatprep.subr.bf16.mxu0 0
        %621 = vmatpush1.bf16.msra.mxu0 0
        %622 = vmatprep.subr.bf16.mxu0 0
        %623 = vmatpush1.bf16.msra.mxu0 0
        %624 = vmatprep.subr.bf16.mxu0 0
        %625 = vmatpush1.bf16.msra.mxu0 0
        %626 = vmatprep.subr.bf16.mxu0 0
        %627 = vmatpush1.bf16.msra.mxu0 0
        %628 = vmatprep.subr.bf16.mxu0 0
        %629 = vmatpush1.bf16.msra.mxu0 0
        %630 = vmatprep.subr.bf16.mxu0 0
        %631 = vmatpush1.bf16.msra.mxu0 0
        %632 = vmatprep.subr.bf16.mxu0 0
        %633 = vmatpush1.bf16.msra.mxu0 0
        %634 = vmatprep.subr.bf16.mxu0 0
        %635 = vmatpush1.bf16.msra.mxu0 0
        %636 = vmatprep.subr.bf16.mxu0 0
        %637 = vmatpush1.bf16.msra.mxu0 0
        %638 = vmatprep.subr.bf16.mxu0 0
        %639 = vmatpush1.bf16.msra.mxu0 0
        %640 = vmatprep.subr.bf16.mxu0 0
        %641 = vmatpush1.bf16.msra.mxu0 0
        %642 = vmatprep.mubr.bf16.mxu0 0
        %643 = vmatmul.mubr.bf16.gmra.mrb[0].mxu0 %v552
        %v644 = vpop.f32.mrb[0].mxu0
        %v645 = vadd.f32 0.0, %v644
        %v646 = vpop.f32.mrb[0].mxu0
        %v647 = vpop.f32.mrb[0].mxu0
        %v648 = vpop.f32.mrb[0].mxu0
        %649 = vdwg.mxu0
        %v650 = vld [vmem:[%s5] sm:$0xf]
        %v651 = vld [vmem:[%s5 + $0x4] sm:$0xf]
        %v652 = vld [vmem:[%s5 + $0x8] sm:$0xf]
        %v653 = vld [vmem:[%s5 + $0xc] sm:$0xf]
        %v658 = vunpack.c.l.b16 %v650
        %v659 = vunpack.c.l.b16 %v651
        %v660 = vunpack.c.l.b16 %v652
        %v661 = vunpack.c.l.b16 %v653
        %v662 = vpack.c.b16 %v659, %v658
        %v663 = vpack.c.b16 %v661, %v660
        %666 = vmatprep.subr.bf16.mxu0 0
        %667 = vmatpush1.bf16.msra.mxu0 %v662
        %668 = vmatprep.subr.bf16.mxu0 0
        %669 = vmatpush1.bf16.msra.mxu0 %v663
        %670 = vmatprep.subr.bf16.mxu0 0
        %671 = vmatpush1.bf16.msra.mxu0 0
        %672 = vmatprep.subr.bf16.mxu0 0
        %673 = vmatpush1.bf16.msra.mxu0 0
        %674 = vmatprep.subr.bf16.mxu0 0
        %675 = vmatpush1.bf16.msra.mxu0 0
        %676 = vmatprep.subr.bf16.mxu0 0
        %677 = vmatpush1.bf16.msra.mxu0 0
        %678 = vmatprep.subr.bf16.mxu0 0
        %679 = vmatpush1.bf16.msra.mxu0 0
        %680 = vmatprep.subr.bf16.mxu0 0
        %681 = vmatpush1.bf16.msra.mxu0 0
        %682 = vmatprep.subr.bf16.mxu0 0
        %683 = vmatpush1.bf16.msra.mxu0 0
        %684 = vmatprep.subr.bf16.mxu0 0
        %685 = vmatpush1.bf16.msra.mxu0 0
        %686 = vmatprep.subr.bf16.mxu0 0
        %687 = vmatpush1.bf16.msra.mxu0 0
        %688 = vmatprep.subr.bf16.mxu0 0
        %689 = vmatpush1.bf16.msra.mxu0 0
        %690 = vmatprep.subr.bf16.mxu0 0
        %691 = vmatpush1.bf16.msra.mxu0 0
        %692 = vmatprep.subr.bf16.mxu0 0
        %693 = vmatpush1.bf16.msra.mxu0 0
        %694 = vmatprep.subr.bf16.mxu0 0
        %695 = vmatpush1.bf16.msra.mxu0 0
        %696 = vmatprep.subr.bf16.mxu0 0
        %697 = vmatpush1.bf16.msra.mxu0 0
        %698 = vmatprep.mubr.bf16.mxu0 0
        %699 = vmatmul.mubr.bf16.gmra.mrb[0].mxu0 %v552
        %v700 = vpop.f32.mrb[0].mxu0
        %v701 = vadd.f32 0.0, %v700
        %v702 = vpop.f32.mrb[0].mxu0
        %v703 = vpop.f32.mrb[0].mxu0
        %v704 = vpop.f32.mrb[0].mxu0
        %705 = vdwg.mxu0
        %v706 = vpack.c.bf16 %v589, %v589
        %v707 = vpack.c.bf16 %v645, %v645
        %v708 = vpack.c.bf16 %v701, %v701
        %vm709 = vcmask 64512
        %v711 = vsel %vm709, %v706, 0
        %v714 = vsel %vm709, %v707, 0
        %716 = vmatprep.subr.bf16.mxu0 0
        %717 = vmatpush1.bf16.xpose.msra.mxu0 %v714
        %718 = vmatprep.subr.bf16.mxu0 0
        %719 = vmatpush1.bf16.xpose.msra.mxu0 0
        %720 = vmatprep.subr.bf16.mxu0 0
        %721 = vmatpush1.bf16.xpose.msra.mxu0 0
        %722 = vmatprep.subr.bf16.mxu0 0
        %723 = vmatpush1.bf16.xpose.msra.mxu0 0
        %724 = vmatprep.subr.bf16.mxu0 0
        %725 = vmatpush1.bf16.xpose.msra.mxu0 0
        %726 = vmatprep.subr.bf16.mxu0 0
        %727 = vmatpush1.bf16.xpose.msra.mxu0 0
        %728 = vmatprep.subr.bf16.mxu0 0
        %729 = vmatpush1.bf16.xpose.msra.mxu0 0
        %730 = vmatprep.subr.bf16.mxu0 0
        %731 = vmatpush1.bf16.xpose.msra.mxu0 0
        %732 = vmatprep.subr.bf16.mxu0 0
        %733 = vmatpush1.bf16.xpose.msra.mxu0 0
        %734 = vmatprep.subr.bf16.mxu0 0
        %735 = vmatpush1.bf16.xpose.msra.mxu0 0
        %736 = vmatprep.subr.bf16.mxu0 0
        %737 = vmatpush1.bf16.xpose.msra.mxu0 0
        %738 = vmatprep.subr.bf16.mxu0 0
        %739 = vmatpush1.bf16.xpose.msra.mxu0 0
        %740 = vmatprep.subr.bf16.mxu0 0
        %741 = vmatpush1.bf16.xpose.msra.mxu0 0
        %742 = vmatprep.subr.bf16.mxu0 0
        %743 = vmatpush1.bf16.xpose.msra.mxu0 0
        %744 = vmatprep.subr.bf16.mxu0 0
        %745 = vmatpush1.bf16.xpose.msra.mxu0 0
        %746 = vmatprep.subr.bf16.mxu0 0
        %747 = vmatpush1.bf16.xpose.msra.mxu0 0
        %748 = vmatprep.mubr.bf16.mxu0 0
        %749 = vmatmul.mubr.bf16.gmra.mrb[0].mxu0 %v711
        %v750 = vpop.f32.mrb[0].mxu0
        %v751 = vadd.f32 0.0, %v750
        %v752 = vpop.f32.mrb[0].mxu0
        %v753 = vpop.f32.mrb[0].mxu0
        %v754 = vpop.f32.mrb[0].mxu0
        %755 = vdwg.mxu0
        %v756 = vsel %vm709, %v751, -inf
        %757 = vmax.xlane.f32.xlu0 %v756
        %v758 = vpop.xlane.xlu0 %757
        %v759 = vsub.f32 %v751, %v758
        %v760 = vmul.f32 %v759, 1.442695
        %v761 = vpow.pop %v760
        %v762 = vsel %vm709, %v761, 0.0
        %763 = vadd.xlane.f32.xlu0 %v762
        %v764 = vpop.xlane.xlu0 %763
        %v765 = vrcp.pop %v764
        %v766 = vmul.f32 %v761, %v765
        %v767 = vpack.c.bf16 %v766, %v766
        %v769 = vsel %vm709, %v767, 0
        %vm771 = vcmask 1043456
        %v773 = vsel %vm771, %v708, 0
        %775 = vmatprep.subr.bf16.mxu0 0
        %776 = vmatpush1.bf16.msra.mxu0 %v773
        %777 = vmatprep.subr.bf16.mxu0 0
        %778 = vmatpush1.bf16.msra.mxu0 0
        %779 = vmatprep.subr.bf16.mxu0 0
        %780 = vmatpush1.bf16.msra.mxu0 0
        %781 = vmatprep.subr.bf16.mxu0 0
        %782 = vmatpush1.bf16.msra.mxu0 0
        %783 = vmatprep.subr.bf16.mxu0 0
        %784 = vmatpush1.bf16.msra.mxu0 0
        %785 = vmatprep.subr.bf16.mxu0 0
        %786 = vmatpush1.bf16.msra.mxu0 0
        %787 = vmatprep.subr.bf16.mxu0 0
        %788 = vmatpush1.bf16.msra.mxu0 0
        %789 = vmatprep.subr.bf16.mxu0 0
        %790 = vmatpush1.bf16.msra.mxu0 0
        %791 = vmatprep.subr.bf16.mxu0 0
        %792 = vmatpush1.bf16.msra.mxu0 0
        %793 = vmatprep.subr.bf16.mxu0 0
        %794 = vmatpush1.bf16.msra.mxu0 0
        %795 = vmatprep.subr.bf16.mxu0 0
        %796 = vmatpush1.bf16.msra.mxu0 0
        %797 = vmatprep.subr.bf16.mxu0 0
        %798 = vmatpush1.bf16.msra.mxu0 0
        %799 = vmatprep.subr.bf16.mxu0 0
        %800 = vmatpush1.bf16.msra.mxu0 0
        %801 = vmatprep.subr.bf16.mxu0 0
        %802 = vmatpush1.bf16.msra.mxu0 0
        %803 = vmatprep.subr.bf16.mxu0 0
        %804 = vmatpush1.bf16.msra.mxu0 0
        %805 = vmatprep.subr.bf16.mxu0 0
        %806 = vmatpush1.bf16.msra.mxu0 0
        %807 = vmatprep.mubr.bf16.mxu0 0
        %808 = vmatmul.mubr.bf16.gmra.mrb[0].mxu0 %v769
        %v809 = vpop.f32.mrb[0].mxu0
        %v810 = vadd.f32 0.0, %v809
        %v811 = vpop.f32.mrb[0].mxu0
        %v812 = vpop.f32.mrb[0].mxu0
        %v813 = vpop.f32.mrb[0].mxu0
        %814 = vdwg.mxu0
        %v815 = vpack.c.bf16 %v810, %v810
        %v816 = vld [vmem:[%s6] sm:$0xf]
        %818 = vrot.lane.b32.xlu0 %v706, 120
        %v819 = vpop.permute.xlu0 %818
        %821 = vrot.lane.b32.xlu0 %v707, 120
        %v822 = vpop.permute.xlu0 %821
        %v824 = vsel %vm709, %v819, 0
        %v827 = vsel %vm709, %v822, 0
        %829 = vmatprep.subr.bf16.mxu0 0
        %830 = vmatpush1.bf16.xpose.msra.mxu0 %v827
        %831 = vmatprep.subr.bf16.mxu0 0
        %832 = vmatpush1.bf16.xpose.msra.mxu0 0
        %833 = vmatprep.subr.bf16.mxu0 0
        %834 = vmatpush1.bf16.xpose.msra.mxu0 0
        %835 = vmatprep.subr.bf16.mxu0 0
        %836 = vmatpush1.bf16.xpose.msra.mxu0 0
        %837 = vmatprep.subr.bf16.mxu0 0
        %838 = vmatpush1.bf16.xpose.msra.mxu0 0
        %839 = vmatprep.subr.bf16.mxu0 0
        %840 = vmatpush1.bf16.xpose.msra.mxu0 0
        %841 = vmatprep.subr.bf16.mxu0 0
        %842 = vmatpush1.bf16.xpose.msra.mxu0 0
        %843 = vmatprep.subr.bf16.mxu0 0
        %844 = vmatpush1.bf16.xpose.msra.mxu0 0
        %845 = vmatprep.subr.bf16.mxu0 0
        %846 = vmatpush1.bf16.xpose.msra.mxu0 0
        %847 = vmatprep.subr.bf16.mxu0 0
        %848 = vmatpush1.bf16.xpose.msra.mxu0 0
        %849 = vmatprep.subr.bf16.mxu0 0
        %850 = vmatpush1.bf16.xpose.msra.mxu0 0
        %851 = vmatprep.subr.bf16.mxu0 0
        %852 = vmatpush1.bf16.xpose.msra.mxu0 0
        %853 = vmatprep.subr.bf16.mxu0 0
        %854 = vmatpush1.bf16.xpose.msra.mxu0 0
        %855 = vmatprep.subr.bf16.mxu0 0
        %856 = vmatpush1.bf16.xpose.msra.mxu0 0
        %857 = vmatprep.subr.bf16.mxu0 0
        %858 = vmatpush1.bf16.xpose.msra.mxu0 0
        %859 = vmatprep.subr.bf16.mxu0 0
        %860 = vmatpush1.bf16.xpose.msra.mxu0 0
        %861 = vmatprep.mubr.bf16.mxu0 0
        %862 = vmatmul.mubr.bf16.gmra.mrb[0].mxu0 %v824
        %v863 = vpop.f32.mrb[0].mxu0
        %v864 = vadd.f32 0.0, %v863
        %v865 = vpop.f32.mrb[0].mxu0
        %v866 = vpop.f32.mrb[0].mxu0
        %v867 = vpop.f32.mrb[0].mxu0
        %868 = vdwg.mxu0
        %v869 = vsel %vm709, %v864, -inf
        %870 = vmax.xlane.f32.xlu0 %v869
        %v871 = vpop.xlane.xlu0 %870
        %v872 = vsub.f32 %v864, %v871
        %v873 = vmul.f32 %v872, 1.442695
        %v874 = vpow.pop %v873
        %v875 = vsel %vm709, %v874, 0.0
        %876 = vadd.xlane.f32.xlu0 %v875
        %v877 = vpop.xlane.xlu0 %876
        %v878 = vrcp.pop %v877
        %v879 = vmul.f32 %v874, %v878
        %v880 = vpack.c.bf16 %v879, %v879
        %882 = vrot.lane.b32.xlu0 %v708, 120
        %v883 = vpop.permute.xlu0 %882
        %v885 = vsel %vm709, %v880, 0
        %v888 = vsel %vm771, %v883, 0
        %890 = vmatprep.subr.bf16.mxu0 0
        %891 = vmatpush1.bf16.msra.mxu0 %v888
        %892 = vmatprep.subr.bf16.mxu0 0
        %893 = vmatpush1.bf16.msra.mxu0 0
        %894 = vmatprep.subr.bf16.mxu0 0
        %895 = vmatpush1.bf16.msra.mxu0 0
        %896 = vmatprep.subr.bf16.mxu0 0
        %897 = vmatpush1.bf16.msra.mxu0 0
        %898 = vmatprep.subr.bf16.mxu0 0
        %899 = vmatpush1.bf16.msra.mxu0 0
        %900 = vmatprep.subr.bf16.mxu0 0
        %901 = vmatpush1.bf16.msra.mxu0 0
        %902 = vmatprep.subr.bf16.mxu0 0
        %903 = vmatpush1.bf16.msra.mxu0 0
        %904 = vmatprep.subr.bf16.mxu0 0
        %905 = vmatpush1.bf16.msra.mxu0 0
        %906 = vmatprep.subr.bf16.mxu0 0
        %907 = vmatpush1.bf16.msra.mxu0 0
        %908 = vmatprep.subr.bf16.mxu0 0
        %909 = vmatpush1.bf16.msra.mxu0 0
        %910 = vmatprep.subr.bf16.mxu0 0
        %911 = vmatpush1.bf16.msra.mxu0 0
        %912 = vmatprep.subr.bf16.mxu0 0
        %913 = vmatpush1.bf16.msra.mxu0 0
        %914 = vmatprep.subr.bf16.mxu0 0
        %915 = vmatpush1.bf16.msra.mxu0 0
        %916 = vmatprep.subr.bf16.mxu0 0
        %917 = vmatpush1.bf16.msra.mxu0 0
        %918 = vmatprep.subr.bf16.mxu0 0
        %919 = vmatpush1.bf16.msra.mxu0 0
        %920 = vmatprep.subr.bf16.mxu0 0
        %921 = vmatpush1.bf16.msra.mxu0 0
        %922 = vmatprep.mubr.bf16.mxu0 0
        %923 = vmatmul.mubr.bf16.gmra.mrb[0].mxu0 %v885
        %v924 = vpop.f32.mrb[0].mxu0
        %v925 = vadd.f32 0.0, %v924
        %v926 = vpop.f32.mrb[0].mxu0
        %v927 = vpop.f32.mrb[0].mxu0
        %v928 = vpop.f32.mrb[0].mxu0
        %929 = vdwg.mxu0
        %v930 = vpack.c.bf16 %v925, %v925
        %s931 = scalar_lea.vmem %s6, 4
        %v932 = vld [vmem:[%s931] sm:$0xf]
        %v934 = vsel %vm709, %v930, 0
        %v937 = vsel %vm771, %v932, 0
        %939 = vmatprep.subr.bf16.mxu0 0
        %940 = vmatpush1.bf16.msra.mxu0 %v937
        %941 = vmatprep.subr.bf16.mxu0 0
        %942 = vmatpush1.bf16.msra.mxu0 0
        %943 = vmatprep.subr.bf16.mxu0 0
        %944 = vmatpush1.bf16.msra.mxu0 0
        %945 = vmatprep.subr.bf16.mxu0 0
        %946 = vmatpush1.bf16.msra.mxu0 0
        %947 = vmatprep.subr.bf16.mxu0 0
        %948 = vmatpush1.bf16.msra.mxu0 0
        %949 = vmatprep.subr.bf16.mxu0 0
        %950 = vmatpush1.bf16.msra.mxu0 0
        %951 = vmatprep.subr.bf16.mxu0 0
        %952 = vmatpush1.bf16.msra.mxu0 0
        %953 = vmatprep.subr.bf16.mxu0 0
        %954 = vmatpush1.bf16.msra.mxu0 0
        %955 = vmatprep.subr.bf16.mxu0 0
        %956 = vmatpush1.bf16.msra.mxu0 0
        %957 = vmatprep.subr.bf16.mxu0 0
        %958 = vmatpush1.bf16.msra.mxu0 0
        %959 = vmatprep.subr.bf16.mxu0 0
        %960 = vmatpush1.bf16.msra.mxu0 0
        %961 = vmatprep.subr.bf16.mxu0 0
        %962 = vmatpush1.bf16.msra.mxu0 0
        %963 = vmatprep.subr.bf16.mxu0 0
        %964 = vmatpush1.bf16.msra.mxu0 0
        %965 = vmatprep.subr.bf16.mxu0 0
        %966 = vmatpush1.bf16.msra.mxu0 0
        %967 = vmatprep.subr.bf16.mxu0 0
        %968 = vmatpush1.bf16.msra.mxu0 0
        %969 = vmatprep.subr.bf16.mxu0 0
        %970 = vmatpush1.bf16.msra.mxu0 0
        %971 = vmatprep.mubr.bf16.mxu0 0
        %972 = vmatmul.mubr.bf16.gmra.mrb[0].mxu0 %v934
        %v973 = vpop.f32.mrb[0].mxu0
        %v974 = vadd.f32 0.0, %v973
        %v975 = vpop.f32.mrb[0].mxu0
        %v976 = vpop.f32.mrb[0].mxu0
        %v977 = vpop.f32.mrb[0].mxu0
        %978 = vdwg.mxu0
        %v980 = vsel %vm709, %v815, 0
        %v983 = vsel %vm771, %v816, 0
        %985 = vmatprep.subr.bf16.mxu0 0
        %986 = vmatpush1.bf16.msra.mxu0 %v983
        %987 = vmatprep.subr.bf16.mxu0 0
        %988 = vmatpush1.bf16.msra.mxu0 0
        %989 = vmatprep.subr.bf16.mxu0 0
        %990 = vmatpush1.bf16.msra.mxu0 0
        %991 = vmatprep.subr.bf16.mxu0 0
        %992 = vmatpush1.bf16.msra.mxu0 0
        %993 = vmatprep.subr.bf16.mxu0 0
        %994 = vmatpush1.bf16.msra.mxu0 0
        %995 = vmatprep.subr.bf16.mxu0 0
        %996 = vmatpush1.bf16.msra.mxu0 0
        %997 = vmatprep.subr.bf16.mxu0 0
        %998 = vmatpush1.bf16.msra.mxu0 0
        %999 = vmatprep.subr.bf16.mxu0 0
        %1000 = vmatpush1.bf16.msra.mxu0 0
        %1001 = vmatprep.subr.bf16.mxu0 0
        %1002 = vmatpush1.bf16.msra.mxu0 0
        %1003 = vmatprep.subr.bf16.mxu0 0
        %1004 = vmatpush1.bf16.msra.mxu0 0
        %1005 = vmatprep.subr.bf16.mxu0 0
        %1006 = vmatpush1.bf16.msra.mxu0 0
        %1007 = vmatprep.subr.bf16.mxu0 0
        %1008 = vmatpush1.bf16.msra.mxu0 0
        %1009 = vmatprep.subr.bf16.mxu0 0
        %1010 = vmatpush1.bf16.msra.mxu0 0
        %1011 = vmatprep.subr.bf16.mxu0 0
        %1012 = vmatpush1.bf16.msra.mxu0 0
        %1013 = vmatprep.subr.bf16.mxu0 0
        %1014 = vmatpush1.bf16.msra.mxu0 0
        %1015 = vmatprep.subr.bf16.mxu0 0
        %1016 = vmatpush1.bf16.msra.mxu0 0
        %1017 = vmatprep.mubr.bf16.mxu0 0
        %1018 = vmatmul.mubr.bf16.gmra.mrb[0].mxu0 %v980
        %v1019 = vpop.f32.mrb[0].mxu0
        %v1020 = vadd.f32 %v974, %v1019
        %v1021 = vpop.f32.mrb[0].mxu0
        %v1022 = vpop.f32.mrb[0].mxu0
        %v1023 = vpop.f32.mrb[0].mxu0
        %1024 = vdwg.mxu0
        %1025 = vrot.lane.b32.xlu0 %v706, 112
        %v1026 = vpop.permute.xlu0 %1025
        %1027 = vrot.lane.b32.xlu0 %v707, 112
        %v1028 = vpop.permute.xlu0 %1027
        %v1030 = vsel %vm709, %v1026, 0
        %v1033 = vsel %vm709, %v1028, 0
        %1035 = vmatprep.subr.bf16.mxu0 0
        %1036 = vmatpush1.bf16.xpose.msra.mxu0 %v1033
        %1037 = vmatprep.subr.bf16.mxu0 0
        %1038 = vmatpush1.bf16.xpose.msra.mxu0 0
        %1039 = vmatprep.subr.bf16.mxu0 0
        %1040 = vmatpush1.bf16.xpose.msra.mxu0 0
        %1041 = vmatprep.subr.bf16.mxu0 0
        %1042 = vmatpush1.bf16.xpose.msra.mxu0 0
        %1043 = vmatprep.subr.bf16.mxu0 0
        %1044 = vmatpush1.bf16.xpose.msra.mxu0 0
        %1045 = vmatprep.subr.bf16.mxu0 0
        %1046 = vmatpush1.bf16.xpose.msra.mxu0 0
        %1047 = vmatprep.subr.bf16.mxu0 0
        %1048 = vmatpush1.bf16.xpose.msra.mxu0 0
        %1049 = vmatprep.subr.bf16.mxu0 0
        %1050 = vmatpush1.bf16.xpose.msra.mxu0 0
        %1051 = vmatprep.subr.bf16.mxu0 0
        %1052 = vmatpush1.bf16.xpose.msra.mxu0 0
        %1053 = vmatprep.subr.bf16.mxu0 0
        %1054 = vmatpush1.bf16.xpose.msra.mxu0 0
        %1055 = vmatprep.subr.bf16.mxu0 0
        %1056 = vmatpush1.bf16.xpose.msra.mxu0 0
        %1057 = vmatprep.subr.bf16.mxu0 0
        %1058 = vmatpush1.bf16.xpose.msra.mxu0 0
        %1059 = vmatprep.subr.bf16.mxu0 0
        %1060 = vmatpush1.bf16.xpose.msra.mxu0 0
        %1061 = vmatprep.subr.bf16.mxu0 0
        %1062 = vmatpush1.bf16.xpose.msra.mxu0 0
        %1063 = vmatprep.subr.bf16.mxu0 0
        %1064 = vmatpush1.bf16.xpose.msra.mxu0 0
        %1065 = vmatprep.subr.bf16.mxu0 0
        %1066 = vmatpush1.bf16.xpose.msra.mxu0 0
        %1067 = vmatprep.mubr.bf16.mxu0 0
        %1068 = vmatmul.mubr.bf16.gmra.mrb[0].mxu0 %v1030
        %v1069 = vpop.f32.mrb[0].mxu0
        %v1070 = vadd.f32 0.0, %v1069
        %v1071 = vpop.f32.mrb[0].mxu0
        %v1072 = vpop.f32.mrb[0].mxu0
        %v1073 = vpop.f32.mrb[0].mxu0
        %1074 = vdwg.mxu0
        %v1075 = vsel %vm709, %v1070, -inf
        %1076 = vmax.xlane.f32.xlu0 %v1075
        %v1077 = vpop.xlane.xlu0 %1076
        %v1078 = vsub.f32 %v1070, %v1077
        %v1079 = vmul.f32 %v1078, 1.442695
        %v1080 = vpow.pop %v1079
        %v1081 = vsel %vm709, %v1080, 0.0
        %1082 = vadd.xlane.f32.xlu0 %v1081
        %v1083 = vpop.xlane.xlu0 %1082
        %v1084 = vrcp.pop %v1083
        %v1085 = vmul.f32 %v1080, %v1084
        %v1086 = vpack.c.bf16 %v1085, %v1085
        %1087 = vrot.lane.b32.xlu0 %v708, 112
        %v1088 = vpop.permute.xlu0 %1087
        %v1090 = vsel %vm709, %v1086, 0
        %v1093 = vsel %vm771, %v1088, 0
        %1095 = vmatprep.subr.bf16.mxu0 0
        %1096 = vmatpush1.bf16.msra.mxu0 %v1093
        %1097 = vmatprep.subr.bf16.mxu0 0
        %1098 = vmatpush1.bf16.msra.mxu0 0
        %1099 = vmatprep.subr.bf16.mxu0 0
        %1100 = vmatpush1.bf16.msra.mxu0 0
        %1101 = vmatprep.subr.bf16.mxu0 0
        %1102 = vmatpush1.bf16.msra.mxu0 0
        %1103 = vmatprep.subr.bf16.mxu0 0
        %1104 = vmatpush1.bf16.msra.mxu0 0
        %1105 = vmatprep.subr.bf16.mxu0 0
        %1106 = vmatpush1.bf16.msra.mxu0 0
        %1107 = vmatprep.subr.bf16.mxu0 0
        %1108 = vmatpush1.bf16.msra.mxu0 0
        %1109 = vmatprep.subr.bf16.mxu0 0
        %1110 = vmatpush1.bf16.msra.mxu0 0
        %1111 = vmatprep.subr.bf16.mxu0 0
        %1112 = vmatpush1.bf16.msra.mxu0 0
        %1113 = vmatprep.subr.bf16.mxu0 0
        %1114 = vmatpush1.bf16.msra.mxu0 0
        %1115 = vmatprep.subr.bf16.mxu0 0
        %1116 = vmatpush1.bf16.msra.mxu0 0
        %1117 = vmatprep.subr.bf16.mxu0 0
        %1118 = vmatpush1.bf16.msra.mxu0 0
        %1119 = vmatprep.subr.bf16.mxu0 0
        %1120 = vmatpush1.bf16.msra.mxu0 0
        %1121 = vmatprep.subr.bf16.mxu0 0
        %1122 = vmatpush1.bf16.msra.mxu0 0
        %1123 = vmatprep.subr.bf16.mxu0 0
        %1124 = vmatpush1.bf16.msra.mxu0 0
        %1125 = vmatprep.subr.bf16.mxu0 0
        %1126 = vmatpush1.bf16.msra.mxu0 0
        %1127 = vmatprep.mubr.bf16.mxu0 0
        %1128 = vmatmul.mubr.bf16.gmra.mrb[0].mxu0 %v1090
        %v1129 = vpop.f32.mrb[0].mxu0
        %v1130 = vadd.f32 0.0, %v1129
        %v1131 = vpop.f32.mrb[0].mxu0
        %v1132 = vpop.f32.mrb[0].mxu0
        %v1133 = vpop.f32.mrb[0].mxu0
        %1134 = vdwg.mxu0
        %v1135 = vpack.c.bf16 %v1130, %v1130
        %s1136 = scalar_lea.vmem %s6, 8
        %v1137 = vld [vmem:[%s1136] sm:$0xf]
        %v1139 = vsel %vm709, %v1135, 0
        %v1142 = vsel %vm771, %v1137, 0
        %1144 = vmatprep.subr.bf16.mxu0 0
        %1145 = vmatpush1.bf16.msra.mxu0 %v1142
        %1146 = vmatprep.subr.bf16.mxu0 0
        %1147 = vmatpush1.bf16.msra.mxu0 0
        %1148 = vmatprep.subr.bf16.mxu0 0
        %1149 = vmatpush1.bf16.msra.mxu0 0
        %1150 = vmatprep.subr.bf16.mxu0 0
        %1151 = vmatpush1.bf16.msra.mxu0 0
        %1152 = vmatprep.subr.bf16.mxu0 0
        %1153 = vmatpush1.bf16.msra.mxu0 0
        %1154 = vmatprep.subr.bf16.mxu0 0
        %1155 = vmatpush1.bf16.msra.mxu0 0
        %1156 = vmatprep.subr.bf16.mxu0 0
        %1157 = vmatpush1.bf16.msra.mxu0 0
        %1158 = vmatprep.subr.bf16.mxu0 0
        %1159 = vmatpush1.bf16.msra.mxu0 0
        %1160 = vmatprep.subr.bf16.mxu0 0
        %1161 = vmatpush1.bf16.msra.mxu0 0
        %1162 = vmatprep.subr.bf16.mxu0 0
        %1163 = vmatpush1.bf16.msra.mxu0 0
        %1164 = vmatprep.subr.bf16.mxu0 0
        %1165 = vmatpush1.bf16.msra.mxu0 0
        %1166 = vmatprep.subr.bf16.mxu0 0
        %1167 = vmatpush1.bf16.msra.mxu0 0
        %1168 = vmatprep.subr.bf16.mxu0 0
        %1169 = vmatpush1.bf16.msra.mxu0 0
        %1170 = vmatprep.subr.bf16.mxu0 0
        %1171 = vmatpush1.bf16.msra.mxu0 0
        %1172 = vmatprep.subr.bf16.mxu0 0
        %1173 = vmatpush1.bf16.msra.mxu0 0
        %1174 = vmatprep.subr.bf16.mxu0 0
        %1175 = vmatpush1.bf16.msra.mxu0 0
        %1176 = vmatprep.mubr.bf16.mxu0 0
        %1177 = vmatmul.mubr.bf16.gmra.mrb[0].mxu0 %v1139
        %v1178 = vpop.f32.mrb[0].mxu0
        %v1179 = vadd.f32 0.0, %v1178
        %v1180 = vpop.f32.mrb[0].mxu0
        %v1181 = vpop.f32.mrb[0].mxu0
        %v1182 = vpop.f32.mrb[0].mxu0
        %1183 = vdwg.mxu0
        %v1184 = vadd.f32 %v1020, %v1179
        %1185 = vrot.lane.b32.xlu0 %v706, 104
        %v1186 = vpop.permute.xlu0 %1185
        %1187 = vrot.lane.b32.xlu0 %v707, 104
        %v1188 = vpop.permute.xlu0 %1187
        %v1190 = vsel %vm709, %v1186, 0
        %v1193 = vsel %vm709, %v1188, 0
        %1195 = vmatprep.subr.bf16.mxu0 0
        %1196 = vmatpush1.bf16.xpose.msra.mxu0 %v1193
        %1197 = vmatprep.subr.bf16.mxu0 0
        %1198 = vmatpush1.bf16.xpose.msra.mxu0 0
        %1199 = vmatprep.subr.bf16.mxu0 0
        %1200 = vmatpush1.bf16.xpose.msra.mxu0 0
        %1201 = vmatprep.subr.bf16.mxu0 0
        %1202 = vmatpush1.bf16.xpose.msra.mxu0 0
        %1203 = vmatprep.subr.bf16.mxu0 0
        %1204 = vmatpush1.bf16.xpose.msra.mxu0 0
        %1205 = vmatprep.subr.bf16.mxu0 0
        %1206 = vmatpush1.bf16.xpose.msra.mxu0 0
        %1207 = vmatprep.subr.bf16.mxu0 0
        %1208 = vmatpush1.bf16.xpose.msra.mxu0 0
        %1209 = vmatprep.subr.bf16.mxu0 0
        %1210 = vmatpush1.bf16.xpose.msra.mxu0 0
        %1211 = vmatprep.subr.bf16.mxu0 0
        %1212 = vmatpush1.bf16.xpose.msra.mxu0 0
        %1213 = vmatprep.subr.bf16.mxu0 0
        %1214 = vmatpush1.bf16.xpose.msra.mxu0 0
        %1215 = vmatprep.subr.bf16.mxu0 0
        %1216 = vmatpush1.bf16.xpose.msra.mxu0 0
        %1217 = vmatprep.subr.bf16.mxu0 0
        %1218 = vmatpush1.bf16.xpose.msra.mxu0 0
        %1219 = vmatprep.subr.bf16.mxu0 0
        %1220 = vmatpush1.bf16.xpose.msra.mxu0 0
        %1221 = vmatprep.subr.bf16.mxu0 0
        %1222 = vmatpush1.bf16.xpose.msra.mxu0 0
        %1223 = vmatprep.subr.bf16.mxu0 0
        %1224 = vmatpush1.bf16.xpose.msra.mxu0 0
        %1225 = vmatprep.subr.bf16.mxu0 0
        %1226 = vmatpush1.bf16.xpose.msra.mxu0 0
        %1227 = vmatprep.mubr.bf16.mxu0 0
        %1228 = vmatmul.mubr.bf16.gmra.mrb[0].mxu0 %v1190
        %v1229 = vpop.f32.mrb[0].mxu0
        %v1230 = vadd.f32 0.0, %v1229
        %v1231 = vpop.f32.mrb[0].mxu0
        %v1232 = vpop.f32.mrb[0].mxu0
        %v1233 = vpop.f32.mrb[0].mxu0
        %1234 = vdwg.mxu0
        %v1235 = vsel %vm709, %v1230, -inf
        %1236 = vmax.xlane.f32.xlu0 %v1235
        %v1237 = vpop.xlane.xlu0 %1236
        %v1238 = vsub.f32 %v1230, %v1237
        %v1239 = vmul.f32 %v1238, 1.442695
        %v1240 = vpow.pop %v1239
        %v1241 = vsel %vm709, %v1240, 0.0
        %1242 = vadd.xlane.f32.xlu0 %v1241
        %v1243 = vpop.xlane.xlu0 %1242
        %v1244 = vrcp.pop %v1243
        %v1245 = vmul.f32 %v1240, %v1244
        %v1246 = vpack.c.bf16 %v1245, %v1245
        %1247 = vrot.lane.b32.xlu0 %v708, 104
        %v1248 = vpop.permute.xlu0 %1247
        %v1250 = vsel %vm709, %v1246, 0
        %v1253 = vsel %vm771, %v1248, 0
        %1255 = vmatprep.subr.bf16.mxu0 0
        %1256 = vmatpush1.bf16.msra.mxu0 %v1253
        %1257 = vmatprep.subr.bf16.mxu0 0
        %1258 = vmatpush1.bf16.msra.mxu0 0
        %1259 = vmatprep.subr.bf16.mxu0 0
        %1260 = vmatpush1.bf16.msra.mxu0 0
        %1261 = vmatprep.subr.bf16.mxu0 0
        %1262 = vmatpush1.bf16.msra.mxu0 0
        %1263 = vmatprep.subr.bf16.mxu0 0
        %1264 = vmatpush1.bf16.msra.mxu0 0
        %1265 = vmatprep.subr.bf16.mxu0 0
        %1266 = vmatpush1.bf16.msra.mxu0 0
        %1267 = vmatprep.subr.bf16.mxu0 0
        %1268 = vmatpush1.bf16.msra.mxu0 0
        %1269 = vmatprep.subr.bf16.mxu0 0
        %1270 = vmatpush1.bf16.msra.mxu0 0
        %1271 = vmatprep.subr.bf16.mxu0 0
        %1272 = vmatpush1.bf16.msra.mxu0 0
        %1273 = vmatprep.subr.bf16.mxu0 0
        %1274 = vmatpush1.bf16.msra.mxu0 0
        %1275 = vmatprep.subr.bf16.mxu0 0
        %1276 = vmatpush1.bf16.msra.mxu0 0
        %1277 = vmatprep.subr.bf16.mxu0 0
        %1278 = vmatpush1.bf16.msra.mxu0 0
        %1279 = vmatprep.subr.bf16.mxu0 0
        %1280 = vmatpush1.bf16.msra.mxu0 0
        %1281 = vmatprep.subr.bf16.mxu0 0
        %1282 = vmatpush1.bf16.msra.mxu0 0
        %1283 = vmatprep.subr.bf16.mxu0 0
        %1284 = vmatpush1.bf16.msra.mxu0 0
        %1285 = vmatprep.subr.bf16.mxu0 0
        %1286 = vmatpush1.bf16.msra.mxu0 0
        %1287 = vmatprep.mubr.bf16.mxu0 0
        %1288 = vmatmul.mubr.bf16.gmra.mrb[0].mxu0 %v1250
        %v1289 = vpop.f32.mrb[0].mxu0
        %v1290 = vadd.f32 0.0, %v1289
        %v1291 = vpop.f32.mrb[0].mxu0
        %v1292 = vpop.f32.mrb[0].mxu0
        %v1293 = vpop.f32.mrb[0].mxu0
        %1294 = vdwg.mxu0
        %v1295 = vpack.c.bf16 %v1290, %v1290
        %s1296 = scalar_lea.vmem %s6, 12
        %v1297 = vld [vmem:[%s1296] sm:$0xf]
        %v1299 = vsel %vm709, %v1295, 0
        %v1302 = vsel %vm771, %v1297, 0
        %1304 = vmatprep.subr.bf16.mxu0 0
        %1305 = vmatpush1.bf16.msra.mxu0 %v1302
        %1306 = vmatprep.subr.bf16.mxu0 0
        %1307 = vmatpush1.bf16.msra.mxu0 0
        %1308 = vmatprep.subr.bf16.mxu0 0
        %1309 = vmatpush1.bf16.msra.mxu0 0
        %1310 = vmatprep.subr.bf16.mxu0 0
        %1311 = vmatpush1.bf16.msra.mxu0 0
        %1312 = vmatprep.subr.bf16.mxu0 0
        %1313 = vmatpush1.bf16.msra.mxu0 0
        %1314 = vmatprep.subr.bf16.mxu0 0
        %1315 = vmatpush1.bf16.msra.mxu0 0
        %1316 = vmatprep.subr.bf16.mxu0 0
        %1317 = vmatpush1.bf16.msra.mxu0 0
        %1318 = vmatprep.subr.bf16.mxu0 0
        %1319 = vmatpush1.bf16.msra.mxu0 0
        %1320 = vmatprep.subr.bf16.mxu0 0
        %1321 = vmatpush1.bf16.msra.mxu0 0
        %1322 = vmatprep.subr.bf16.mxu0 0
        %1323 = vmatpush1.bf16.msra.mxu0 0
        %1324 = vmatprep.subr.bf16.mxu0 0
        %1325 = vmatpush1.bf16.msra.mxu0 0
        %1326 = vmatprep.subr.bf16.mxu0 0
        %1327 = vmatpush1.bf16.msra.mxu0 0
        %1328 = vmatprep.subr.bf16.mxu0 0
        %1329 = vmatpush1.bf16.msra.mxu0 0
        %1330 = vmatprep.subr.bf16.mxu0 0
        %1331 = vmatpush1.bf16.msra.mxu0 0
        %1332 = vmatprep.subr.bf16.mxu0 0
        %1333 = vmatpush1.bf16.msra.mxu0 0
        %1334 = vmatprep.subr.bf16.mxu0 0
        %1335 = vmatpush1.bf16.msra.mxu0 0
        %1336 = vmatprep.mubr.bf16.mxu0 0
        %1337 = vmatmul.mubr.bf16.gmra.mrb[0].mxu0 %v1299
        %v1338 = vpop.f32.mrb[0].mxu0
        %v1339 = vadd.f32 0.0, %v1338
        %v1340 = vpop.f32.mrb[0].mxu0
        %v1341 = vpop.f32.mrb[0].mxu0
        %v1342 = vpop.f32.mrb[0].mxu0
        %1343 = vdwg.mxu0
        %v1344 = vadd.f32 %v1184, %v1339
        %v1345 = vld [vmem:[#allocation2] sm:$0x1]
        %v1347 = vlaneseq
        %v1348 = vshrl.u32 %v1347, 7
        %v1349 = vsub.s32 0, %v1348
        %v1350 = vrot.slane %v1345, %v1349
        %v1352 = vadd.f32 %v1344, %v1350
        %v1353 = vadd.f32 %v1352, %v502
        %v1354 = vld [vmem:[#allocation5] sm:$0x1]
        %v1355 = vld [vmem:[#allocation7] sm:$0x1]
        %v1356 = vsel %vm505, %v1353, 0.0
        %1357 = vadd.xlane.f32.xlu0 %v1356
        %v1358 = vpop.xlane.xlu0 %1357
        %v1359 = vmul.f32 %v1358, %v509
        %v1360 = vsub.f32 %v1353, %v1359
        %v1361 = vmul.f32 %v1360, %v1360
        %v1362 = vsel %vm505, %v1361, 0.0
        %1363 = vadd.xlane.f32.xlu0 %v1362
        %v1364 = vpop.xlane.xlu0 %1363
        %v1365 = vmul.f32 %v1364, %v509
        %v1366 = vadd.f32 %v1365, 1e-05
        %v1367 = vrsqrt.pop %v1366
        %v1368 = vmul.f32 %v1360, %v1367
        %v1370 = vlaneseq
        %v1371 = vshrl.u32 %v1370, 7
        %v1372 = vsub.s32 0, %v1371
        %v1373 = vrot.slane %v1354, %v1372
        %v1375 = vmul.f32 %v1368, %v1373
        %v1377 = vlaneseq
        %v1378 = vshrl.u32 %v1377, 7
        %v1379 = vsub.s32 0, %v1378
        %v1380 = vrot.slane %v1355, %v1379
        %v1382 = vadd.f32 %v1375, %v1380
        %v1383 = vpack.c.bf16 %v1382, %v1382
        %v1384 = vld [vmem:[%s10] sm:$0xf]
        %v1385 = vld [vmem:[%s10 + $0x4] sm:$0xf]
        %v1386 = vld [vmem:[%s10 + $0x8] sm:$0xf]
        %v1387 = vld [vmem:[%s10 + $0xc] sm:$0xf]
        %v1388 = vld [vmem:[%s11] sm:$0x1]
        %v1390 = vlaneseq
        %v1391 = vshrl.u32 %v1390, 7
        %v1392 = vsub.s32 0, %v1391
        %v1393 = vrot.slane %v1388, %v1392
        %v1399 = vunpack.c.l.b16 %v1384
        %v1400 = vunpack.c.l.b16 %v1385
        %v1401 = vunpack.c.l.b16 %v1386
        %v1402 = vunpack.c.l.b16 %v1387
        %v1403 = vpack.c.b16 %v1400, %v1399
        %v1404 = vpack.c.b16 %v1402, %v1401
        %v1408 = vsel %vm505, %v1383, 0
        %1410 = vmatprep.subr.bf16.mxu0 0
        %1411 = vmatpush1.bf16.msra.mxu0 %v1403
        %1412 = vmatprep.subr.bf16.mxu0 0
        %1413 = vmatpush1.bf16.msra.mxu0 %v1404
        %1414 = vmatprep.subr.bf16.mxu0 0
        %1415 = vmatpush1.bf16.msra.mxu0 0
        %1416 = vmatprep.subr.bf16.mxu0 0
        %1417 = vmatpush1.bf16.msra.mxu0 0
        %1418 = vmatprep.subr.bf16.mxu0 0
        %1419 = vmatpush1.bf16.msra.mxu0 0
        %1420 = vmatprep.subr.bf16.mxu0 0
        %1421 = vmatpush1.bf16.msra.mxu0 0
        %1422 = vmatprep.subr.bf16.mxu0 0
        %1423 = vmatpush1.bf16.msra.mxu0 0
        %1424 = vmatprep.subr.bf16.mxu0 0
        %1425 = vmatpush1.bf16.msra.mxu0 0
        %1426 = vmatprep.subr.bf16.mxu0 0
        %1427 = vmatpush1.bf16.msra.mxu0 0
        %1428 = vmatprep.subr.bf16.mxu0 0
        %1429 = vmatpush1.bf16.msra.mxu0 0
        %1430 = vmatprep.subr.bf16.mxu0 0
        %1431 = vmatpush1.bf16.msra.mxu0 0
        %1432 = vmatprep.subr.bf16.mxu0 0
        %1433 = vmatpush1.bf16.msra.mxu0 0
        %1434 = vmatprep.subr.bf16.mxu0 0
        %1435 = vmatpush1.bf16.msra.mxu0 0
        %1436 = vmatprep.subr.bf16.mxu0 0
        %1437 = vmatpush1.bf16.msra.mxu0 0
        %1438 = vmatprep.subr.bf16.mxu0 0
        %1439 = vmatpush1.bf16.msra.mxu0 0
        %1440 = vmatprep.subr.bf16.mxu0 0
        %1441 = vmatpush1.bf16.msra.mxu0 0
        %1442 = vmatprep.mubr.bf16.mxu0 0
        %1443 = vmatmul.mubr.bf16.gmra.mrb[0].mxu0 %v1408
        %v1444 = vpop.f32.mrb[0].mxu0
        %v1445 = vadd.f32 %v1393, %v1444
        %v1446 = vpop.f32.mrb[0].mxu0
        %v1447 = vpop.f32.mrb[0].mxu0
        %v1448 = vpop.f32.mrb[0].mxu0
        %1449 = vdwg.mxu0
        %v1450 = vmul.f32 %v1445, 0.5
        %v1451 = vmul.f32 %v1445, 0.70710677
        %v1452 = verf.f32.pop %v1451
        %v1453 = vadd.f32 %v1452, 1.0
        %v1454 = vmul.f32 %v1450, %v1453
        %v1455 = vpack.c.bf16 %v1454, %v1454
        %v1456 = vld [vmem:[%s12] sm:$0xf]
        %v1457 = vld [vmem:[%s12 + $0x4] sm:$0xf]
        %v1458 = vld [vmem:[%s12 + $0x8] sm:$0xf]
        %v1459 = vld [vmem:[%s12 + $0xc] sm:$0xf]
        %v1460 = vld [vmem:[%s12 + $0x10] sm:$0xf]
        %v1461 = vld [vmem:[%s12 + $0x14] sm:$0xf]
        %v1462 = vld [vmem:[%s12 + $0x18] sm:$0xf]
        %v1463 = vld [vmem:[%s12 + $0x1c] sm:$0xf]
        %v1464 = vld [vmem:[%s12 + $0x20] sm:$0xf]
        %v1465 = vld [vmem:[%s12 + $0x24] sm:$0xf]
        %v1466 = vld [vmem:[%s12 + $0x28] sm:$0xf]
        %v1467 = vld [vmem:[%s12 + $0x2c] sm:$0xf]
        %v1468 = vld [vmem:[%s12 + $0x30] sm:$0xf]
        %v1469 = vld [vmem:[%s12 + $0x34] sm:$0xf]
        %v1470 = vld [vmem:[%s12 + $0x38] sm:$0xf]
        %v1471 = vld [vmem:[%s12 + $0x3c] sm:$0xf]
        %v1472 = vld [vmem:[%s13] sm:$0x1]
        %v1474 = vlaneseq
        %v1475 = vshrl.u32 %v1474, 7
        %v1476 = vsub.s32 0, %v1475
        %v1477 = vrot.slane %v1472, %v1476
        %v1495 = vunpack.c.l.b16 %v1456
        %v1496 = vunpack.c.l.b16 %v1457
        %v1497 = vunpack.c.l.b16 %v1458
        %v1498 = vunpack.c.l.b16 %v1459
        %v1499 = vunpack.c.l.b16 %v1460
        %v1500 = vunpack.c.l.b16 %v1461
        %v1501 = vunpack.c.l.b16 %v1462
        %v1502 = vunpack.c.l.b16 %v1463
        %v1503 = vunpack.c.l.b16 %v1464
        %v1504 = vunpack.c.l.b16 %v1465
        %v1505 = vunpack.c.l.b16 %v1466
        %v1506 = vunpack.c.l.b16 %v1467
        %v1507 = vunpack.c.l.b16 %v1468
        %v1508 = vunpack.c.l.b16 %v1469
        %v1509 = vunpack.c.l.b16 %v1470
        %v1510 = vunpack.c.l.b16 %v1471
        %v1511 = vpack.c.b16 %v1496, %v1495
        %v1512 = vpack.c.b16 %v1498, %v1497
        %v1513 = vpack.c.b16 %v1500, %v1499
        %v1514 = vpack.c.b16 %v1502, %v1501
        %v1515 = vpack.c.b16 %v1504, %v1503
        %v1516 = vpack.c.b16 %v1506, %v1505
        %v1517 = vpack.c.b16 %v1508, %v1507
        %v1518 = vpack.c.b16 %v1510, %v1509
        %1527 = vmatprep.subr.bf16.mxu0 0
        %1528 = vmatpush1.bf16.msra.mxu0 %v1511
        %1529 = vmatprep.subr.bf16.mxu0 0
        %1530 = vmatpush1.bf16.msra.mxu0 %v1512
        %1531 = vmatprep.subr.bf16.mxu0 0
        %1532 = vmatpush1.bf16.msra.mxu0 %v1513
        %1533 = vmatprep.subr.bf16.mxu0 0
        %1534 = vmatpush1.bf16.msra.mxu0 %v1514
        %1535 = vmatprep.subr.bf16.mxu0 0
        %1536 = vmatpush1.bf16.msra.mxu0 %v1515
        %1537 = vmatprep.subr.bf16.mxu0 0
        %1538 = vmatpush1.bf16.msra.mxu0 %v1516
        %1539 = vmatprep.subr.bf16.mxu0 0
        %1540 = vmatpush1.bf16.msra.mxu0 %v1517
        %1541 = vmatprep.subr.bf16.mxu0 0
        %1542 = vmatpush1.bf16.msra.mxu0 %v1518
        %1543 = vmatprep.subr.bf16.mxu0 0
        %1544 = vmatpush1.bf16.msra.mxu0 0
        %1545 = vmatprep.subr.bf16.mxu0 0
        %1546 = vmatpush1.bf16.msra.mxu0 0
        %1547 = vmatprep.subr.bf16.mxu0 0
        %1548 = vmatpush1.bf16.msra.mxu0 0
        %1549 = vmatprep.subr.bf16.mxu0 0
        %1550 = vmatpush1.bf16.msra.mxu0 0
        %1551 = vmatprep.subr.bf16.mxu0 0
        %1552 = vmatpush1.bf16.msra.mxu0 0
        %1553 = vmatprep.subr.bf16.mxu0 0
        %1554 = vmatpush1.bf16.msra.mxu0 0
        %1555 = vmatprep.subr.bf16.mxu0 0
        %1556 = vmatpush1.bf16.msra.mxu0 0
        %1557 = vmatprep.subr.bf16.mxu0 0
        %1558 = vmatpush1.bf16.msra.mxu0 0
        %1559 = vmatprep.mubr.bf16.mxu0 0
        %1560 = vmatmul.mubr.bf16.gmra.mrb[0].mxu0 %v1455
        %v1561 = vpop.f32.mrb[0].mxu0
        %v1562 = vadd.f32 %v1477, %v1561
        %v1563 = vpop.f32.mrb[0].mxu0
        %v1564 = vpop.f32.mrb[0].mxu0
        %v1565 = vpop.f32.mrb[0].mxu0
        %1566 = vdwg.mxu0
        %v1567 = vadd.f32 %v1353, %v1562
        %1568 = vst.msk [vmem:[%s496] sm:$0xff] %vm505, %v1567
        %s1569 = sand.u32 %s337, 1
        %s1570 = scalar_lea.sflag [#allocation4], %s1569
        %s1571 = sand.u32 %s337, 1
        %s1572 = smul.addr %s1571, 8
        %s1573 = scalar_lea.vmem [#allocation8], %s1572
        // Predicated region
        $region89: #{tpu_custom_call.1} parent=75 // pred_check
          %p1574 = pneg %p347
        $region90: #{tpu_custom_call.1} parent=75 // pred_check_branch
          %1576 = sbr.rel (%p1574) target = $region92
        $region91: #{tpu_custom_call.1} parent=75 // pred_region
          %s1578 = ssub.s32 128, 128
          %1579 = vsyncadd %s1570, %s1578
          %s1580 = smul.addr %s30, 128
          %s1581 = scalar_lea.hbm %s14, %s1580
          %s1583 = sshll.u32 %s1573, 4
          %s1584 = int_to_ptr.vmem [resolvable:$true] %s1583
          %1586 = dma.vmem_to_hbm [thread:$0]  %s1584, 128, %s1581, %s1570
        $region92: #{tpu_custom_call.1} parent=75 // pred_fallthru
          _
      $region76: #{tpu_custom_call.1} parent=5 // pred_fallthru
        _
      %p1587 = scmp.le.s32.totalorder 2, %s25
      // Predicated region
      $region93: #{tpu_custom_call.1} parent=5 // pred_check
        %p1588 = pneg %p1587
      $region94: #{tpu_custom_call.1} parent=5 // pred_check_branch
        %1590 = sbr.rel (%p1588) target = $region96
      $region95: #{tpu_custom_call.1} parent=5 // pred_region
        %s1591 = ssub.s32 %s25, 2
        // Predicated region
        $region97: #{tpu_custom_call.1} parent=95 // pred_check
          %p1592 = pneg %p353
        $region98: #{tpu_custom_call.1} parent=95 // pred_check_branch
          %1594 = sbr.rel (%p1592) target = $region100
        $region99: #{tpu_custom_call.1} parent=95 // pred_region
          %s1595 = sand.u32 %s338, 1
          %s1596 = scalar_lea.sflag [#allocation4], %s1595
          %s1597 = sand.u32 %s338, 1
          %s1598 = smul.addr %s1597, 8
          %s1599 = scalar_lea.vmem [#allocation8], %s1598
          %1600 = dma.done %s1596, 128
        $region100: #{tpu_custom_call.1} parent=95 // pred_fallthru
          _
      $region96: #{tpu_custom_call.1} parent=5 // pred_fallthru
        _
    $region6: #{tpu_custom_call.1} parent=1 // loop_footer
      %s29 = sadd.s32 1, %s25
    $region7: #{tpu_custom_call.1} parent=1 // loop_footer_branch
      %24 = sbr.rel target = $region3
    $region8: #{tpu_custom_call.1} parent=1 // loop_exit
      _
    %1601 = vsyncpa [#allocation3], 1
    %s1602 = scalar_lea.sflag [#allocation3], 1
    %1603 = vsyncpa %s1602, 1
    %1604 = vsyncpa [#allocation6], 1
    %1605 = vsyncpa [#allocation4], 1
    %s1606 = scalar_lea.sflag [#allocation4], 1
    %1607 = vsyncpa %s1606, 1

</llo_original>
